<compile_context>
chip_gen: v6e
topology: v6e:2x2x1
jax: 0.10.0
libtpu: 0.0.40
codegen_flags: <defaults>
</compile_context>

<pallas_src>
import functools

import jax
import jax.numpy as jnp
from jax.experimental import pallas as pl
from jax.experimental.pallas import tpu as pltpu

EPS = 1e-5


def _shift2d(x, dh, dw):
    """t[h, w, :] = x[h + dh, w + dw, :], zero where out of range ('same' pad)."""
    H, W, C = x.shape
    if dh > 0:
        x = jnp.concatenate([x[dh:], jnp.zeros((dh, W, C), x.dtype)], axis=0)
    elif dh < 0:
        x = jnp.concatenate([jnp.zeros((-dh, W, C), x.dtype), x[:H + dh]], axis=0)
    if dw > 0:
        x = jnp.concatenate([x[:, dw:], jnp.zeros((H, dw, C), x.dtype)], axis=1)
    elif dw < 0:
        x = jnp.concatenate([jnp.zeros((H, -dw, C), x.dtype), x[:, :W + dw]], axis=1)
    return x


def _conv_stats_kernel(x_ref, w_ref, y_ref, stat_ref, *, ksize):
    """Per-image k x k 'same' conv as ONE im2col matmul + one-pass BN partials."""
    _, H, W, Cin = x_ref.shape
    Cout = w_ref.shape[1]
    K = ksize * ksize * Cin
    r = ksize // 2

    x = x_ref[0]                                            # (H, W, Cin) f32

    taps = []
    for dh in range(-r, r + 1):
        for dw in range(-r, r + 1):
            taps.append(_shift2d(x, dh, dw))
    patches = jnp.concatenate(taps, axis=-1)                # (H, W, K)
    patches = patches.reshape(H * W, K).astype(jnp.bfloat16)

    # Single fused MXU matmul: bf16 operands, f32 accumulation.
    y = jnp.dot(patches, w_ref[...], preferred_element_type=jnp.float32)

    y_ref[...] = y.reshape(1, H, W, Cout)
    s = jnp.sum(y, axis=0, keepdims=True)                   # (1, Cout)
    ss = jnp.sum(y * y, axis=0, keepdims=True)               # (1, Cout)
    stat_ref[...] = jnp.concatenate([s, ss], axis=0).reshape(1, 2, Cout)


def _bn_relu_kernel(y_ref, stat_ref, g_ref, b_ref, o_ref, *, count):
    """Reduce per-image partials -> batch stats -> normalize + ReLU."""
    tot = jnp.sum(stat_ref[...], axis=0)                    # (2, Cout) f32
    inv = 1.0 / count
    mean = tot[0:1, :] * inv                                # (1, Cout)
    var = tot[1:2, :] * inv - mean * mean                   # biased variance
    scale = g_ref[...] * jax.lax.rsqrt(var + EPS)           # (1, Cout)
    shift = b_ref[...] - mean * scale
    o_ref[...] = jnp.maximum(y_ref[...] * scale + shift, 0.0).astype(o_ref.dtype)


def vgg_block(x, params, kernel_size):
    """x: (N, H, W, Cin) f32, NHWC.  params: list of (w_hwio, gamma(1,C), beta(1,C))."""
    assert kernel_size % 2 == 1, "padding=k//2 is 'same' only for odd kernel_size"
    N, H, W, _ = x.shape
    row_tiles = 2 if H % 2 == 0 else 1
    TH = H // row_tiles

    h = x
    for w, gamma, beta in params:
        kh, kw, Cin, Cout = w.shape
        assert kh == kw == kernel_size
        K = kh * kw * Cin
        w2d = w.reshape(K, Cout).astype(jnp.bfloat16)       # bf16 MXU operand

        # Pass 1: conv + per-image BN partial sums.
        y, stats = pl.pallas_call(
            functools.partial(_conv_stats_kernel, ksize=kernel_size),
            grid=(N,),
            in_specs=[
                pl.BlockSpec((1, H, W, Cin), lambda n: (n, 0, 0, 0)),
                pl.BlockSpec((K, Cout), lambda n: (0, 0)),
            ],
            out_specs=(
                pl.BlockSpec((1, H, W, Cout), lambda n: (n, 0, 0, 0)),
                pl.BlockSpec((1, 2, Cout), lambda n: (n, 0, 0)),
            ),
            out_shape=(
                jax.ShapeDtypeStruct((N, H, W, Cout), jnp.float32),
                jax.ShapeDtypeStruct((N, 2, Cout), jnp.float32),
            ),
            compiler_params=pltpu.CompilerParams(
                dimension_semantics=("parallel",)),
        )(h, w2d)

        # Pass 2: BN normalize + ReLU, tiled over batch and H rows.
        h = pl.pallas_call(
            functools.partial(_bn_relu_kernel, count=float(N * H * W)),
            grid=(N, row_tiles),
            in_specs=[
                pl.BlockSpec((1, TH, W, Cout), lambda n, t: (n, t, 0, 0)),
                pl.BlockSpec((N, 2, Cout), lambda n, t: (0, 0, 0)),
                pl.BlockSpec((1, Cout), lambda n, t: (0, 0)),
                pl.BlockSpec((1, Cout), lambda n, t: (0, 0)),
            ],
            out_specs=pl.BlockSpec((1, TH, W, Cout), lambda n, t: (n, t, 0, 0)),
            out_shape=jax.ShapeDtypeStruct((N, H, W, Cout), x.dtype),
            compiler_params=pltpu.CompilerParams(
                dimension_semantics=("parallel", "parallel")),
        )(y, stats, gamma, beta)
    return h


def reference(x, params):
    """Pure-JAX NHWC reference mirroring the PyTorch forward in train mode
    (conv operands cast to bf16 to match the kernel's MXU precision)."""
    dn = ("NHWC", "HWIO", "NHWC")
    h = x
    for w, gamma, beta in params:
        y = jax.lax.conv_general_dilated(
            h.astype(jnp.bfloat16), w.astype(jnp.bfloat16), (1, 1), "SAME",
            dimension_numbers=dn, preferred_element_type=jnp.float32)
        mean = y.mean(axis=(0, 1, 2), keepdims=True)
        var = ((y - mean) ** 2).mean(axis=(0, 1, 2), keepdims=True)
        yn = (y - mean) * jax.lax.rsqrt(var + EPS) * gamma.reshape(1, 1, 1, -1) \
             + beta.reshape(1, 1, 1, -1)
        h = jnp.maximum(yn, 0.0).astype(x.dtype)
    return h


if __name__ == "__main__":
    key = jax.random.PRNGKey(0)
    N, H, W = 2, 16, 16
    in_channels, out_channels = 64, 128     # lane-dense (128) output channels
    kernel_size, num_convs = 3, 2

    keys = jax.random.split(key, 1 + 3 * num_convs)
    x = jax.random.normal(keys[0], (N, H, W, in_channels), jnp.float32)

    params = []
    cin = in_channels
    for i in range(num_convs):
        kw_, kg, kb = keys[1 + 3 * i], keys[2 + 3 * i], keys[3 + 3 * i]
        fan_in = kernel_size * kernel_size * cin
        w = jax.random.normal(
            kw_, (kernel_size, kernel_size, cin, out_channels),
            jnp.float32) * (1.0 / fan_in ** 0.5)
        gamma = jax.random.uniform(kg, (1, out_channels), jnp.float32, 0.5, 1.5)
        beta = jax.random.normal(kb, (1, out_channels), jnp.float32) * 0.1
        params.append((w, gamma, beta))
        cin = out_channels

    out = jax.block_until_ready(vgg_block(x, params, kernel_size))
    ref = reference(x, params)

    assert out.shape == (N, H, W, out_channels)
    err = float(jnp.max(jnp.abs(out - ref)))
    assert err < 5e-3, f"max abs err {err}"
    print("KERNEL_OK")
</pallas_src>

<mosaic_0001>
module attributes {stable_mosaic.version = 11 : i64} {
  func.func @_conv_stats_kernel(%arg0: i32, %arg1: memref<1x16x16x64xf32, #tpu.memory_space<vmem>>, %arg2: memref<576x128xbf16, #tpu.memory_space<vmem>>, %arg3: memref<1x16x16x128xf32, #tpu.memory_space<vmem>>, %arg4: memref<1x2x128xf32, #tpu.memory_space<vmem>>) attributes {dimension_semantics = [#tpu.dimension_semantics<parallel>], iteration_bounds = array<i64: 2>, scalar_prefetch = 0 : i64, scratch_operands = 0 : i64, tpu.core_type = #tpu.core_type<tc>, window_params = [{transform_indices = @transform_0, window_bounds = array<i64: 1, 16, 16, 64>}, {pipeline_mode = #tpu.pipeline_mode<synchronous>, transform_indices = @transform_1, window_bounds = array<i64: 576, 128>}, {transform_indices = @transform_2, window_bounds = array<i64: 1, 16, 16, 128>}, {transform_indices = @transform_3, window_bounds = array<i64: 1, 2, 128>}]} {
    %c0 = arith.constant 0 : index
    %c0_0 = arith.constant 0 : index
    %c0_1 = arith.constant 0 : index
    %c0_2 = arith.constant 0 : index
    %0 = vector.load %arg1[%c0, %c0_0, %c0_1, %c0_2] : memref<1x16x16x64xf32, #tpu.memory_space<vmem>>, vector<1x16x16x64xf32>
    %1 = vector.shape_cast %0 : vector<1x16x16x64xf32> to vector<16x16x64xf32>
    %cst = arith.constant 0.000000e+00 : f32
    %2 = vector.broadcast %cst : f32 to vector<1x16x64xf32>
    %3 = vector.extract_strided_slice %1 {offsets = [0, 0, 0], sizes = [15, 16, 64], strides = [1, 1, 1]} : vector<16x16x64xf32> to vector<15x16x64xf32>
    %4 = tpu.concatenate %2, %3 in 0 : vector<1x16x64xf32>, vector<15x16x64xf32> -> vector<16x16x64xf32>
    %cst_3 = arith.constant 0.000000e+00 : f32
    %5 = vector.broadcast %cst_3 : f32 to vector<16x1x64xf32>
    %6 = vector.extract_strided_slice %4 {offsets = [0, 0, 0], sizes = [16, 15, 64], strides = [1, 1, 1]} : vector<16x16x64xf32> to vector<16x15x64xf32>
    %7 = tpu.concatenate %5, %6 in 1 : vector<16x1x64xf32>, vector<16x15x64xf32> -> vector<16x16x64xf32>
    %cst_4 = arith.constant 0.000000e+00 : f32
    %8 = vector.broadcast %cst_4 : f32 to vector<1x16x64xf32>
    %9 = vector.extract_strided_slice %1 {offsets = [0, 0, 0], sizes = [15, 16, 64], strides = [1, 1, 1]} : vector<16x16x64xf32> to vector<15x16x64xf32>
    %10 = tpu.concatenate %8, %9 in 0 : vector<1x16x64xf32>, vector<15x16x64xf32> -> vector<16x16x64xf32>
    %cst_5 = arith.constant 0.000000e+00 : f32
    %11 = vector.broadcast %cst_5 : f32 to vector<1x16x64xf32>
    %12 = vector.extract_strided_slice %1 {offsets = [0, 0, 0], sizes = [15, 16, 64], strides = [1, 1, 1]} : vector<16x16x64xf32> to vector<15x16x64xf32>
    %13 = tpu.concatenate %11, %12 in 0 : vector<1x16x64xf32>, vector<15x16x64xf32> -> vector<16x16x64xf32>
    %14 = vector.extract_strided_slice %13 {offsets = [0, 1, 0], sizes = [16, 15, 64], strides = [1, 1, 1]} : vector<16x16x64xf32> to vector<16x15x64xf32>
    %cst_6 = arith.constant 0.000000e+00 : f32
    %15 = vector.broadcast %cst_6 : f32 to vector<16x1x64xf32>
    %16 = tpu.concatenate %14, %15 in 1 : vector<16x15x64xf32>, vector<16x1x64xf32> -> vector<16x16x64xf32>
    %cst_7 = arith.constant 0.000000e+00 : f32
    %17 = vector.broadcast %cst_7 : f32 to vector<16x1x64xf32>
    %18 = vector.extract_strided_slice %1 {offsets = [0, 0, 0], sizes = [16, 15, 64], strides = [1, 1, 1]} : vector<16x16x64xf32> to vector<16x15x64xf32>
    %19 = tpu.concatenate %17, %18 in 1 : vector<16x1x64xf32>, vector<16x15x64xf32> -> vector<16x16x64xf32>
    %20 = vector.extract_strided_slice %1 {offsets = [0, 1, 0], sizes = [16, 15, 64], strides = [1, 1, 1]} : vector<16x16x64xf32> to vector<16x15x64xf32>
    %cst_8 = arith.constant 0.000000e+00 : f32
    %21 = vector.broadcast %cst_8 : f32 to vector<16x1x64xf32>
    %22 = tpu.concatenate %20, %21 in 1 : vector<16x15x64xf32>, vector<16x1x64xf32> -> vector<16x16x64xf32>
    %23 = vector.extract_strided_slice %1 {offsets = [1, 0, 0], sizes = [15, 16, 64], strides = [1, 1, 1]} : vector<16x16x64xf32> to vector<15x16x64xf32>
    %cst_9 = arith.constant 0.000000e+00 : f32
    %24 = vector.broadcast %cst_9 : f32 to vector<1x16x64xf32>
    %25 = tpu.concatenate %23, %24 in 0 : vector<15x16x64xf32>, vector<1x16x64xf32> -> vector<16x16x64xf32>
    %cst_10 = arith.constant 0.000000e+00 : f32
    %26 = vector.broadcast %cst_10 : f32 to vector<16x1x64xf32>
    %27 = vector.extract_strided_slice %25 {offsets = [0, 0, 0], sizes = [16, 15, 64], strides = [1, 1, 1]} : vector<16x16x64xf32> to vector<16x15x64xf32>
    %28 = tpu.concatenate %26, %27 in 1 : vector<16x1x64xf32>, vector<16x15x64xf32> -> vector<16x16x64xf32>
    %29 = vector.extract_strided_slice %1 {offsets = [1, 0, 0], sizes = [15, 16, 64], strides = [1, 1, 1]} : vector<16x16x64xf32> to vector<15x16x64xf32>
    %cst_11 = arith.constant 0.000000e+00 : f32
    %30 = vector.broadcast %cst_11 : f32 to vector<1x16x64xf32>
    %31 = tpu.concatenate %29, %30 in 0 : vector<15x16x64xf32>, vector<1x16x64xf32> -> vector<16x16x64xf32>
    %32 = vector.extract_strided_slice %1 {offsets = [1, 0, 0], sizes = [15, 16, 64], strides = [1, 1, 1]} : vector<16x16x64xf32> to vector<15x16x64xf32>
    %cst_12 = arith.constant 0.000000e+00 : f32
    %33 = vector.broadcast %cst_12 : f32 to vector<1x16x64xf32>
    %34 = tpu.concatenate %32, %33 in 0 : vector<15x16x64xf32>, vector<1x16x64xf32> -> vector<16x16x64xf32>
    %35 = vector.extract_strided_slice %34 {offsets = [0, 1, 0], sizes = [16, 15, 64], strides = [1, 1, 1]} : vector<16x16x64xf32> to vector<16x15x64xf32>
    %cst_13 = arith.constant 0.000000e+00 : f32
    %36 = vector.broadcast %cst_13 : f32 to vector<16x1x64xf32>
    %37 = tpu.concatenate %35, %36 in 1 : vector<16x15x64xf32>, vector<16x1x64xf32> -> vector<16x16x64xf32>
    %38 = tpu.concatenate %7, %10, %16, %19, %1, %22, %28, %31, %37 in 2 : vector<16x16x64xf32>, vector<16x16x64xf32>, vector<16x16x64xf32>, vector<16x16x64xf32>, vector<16x16x64xf32>, vector<16x16x64xf32>, vector<16x16x64xf32>, vector<16x16x64xf32>, vector<16x16x64xf32> -> vector<16x16x576xf32>
    %39 = vector.shape_cast %38 : vector<16x16x576xf32> to vector<256x576xf32>
    %40 = arith.truncf %39 : vector<256x576xf32> to vector<256x576xbf16>
    %c0_14 = arith.constant 0 : index
    %c0_15 = arith.constant 0 : index
    %41 = vector.load %arg2[%c0_14, %c0_15] : memref<576x128xbf16, #tpu.memory_space<vmem>>, vector<576x128xbf16>
    %cst_16 = arith.constant dense<0.000000e+00> : vector<256x128xf32>
    %42 = tpu.matmul %40, %41, %cst_16 {dimension_numbers = #tpu.dot_dimension_numbers<[1], [0], [0], [1], [0, 0, 1, 1], [], []>} : vector<256x576xbf16>, vector<576x128xbf16>, vector<256x128xf32> -> vector<256x128xf32>
    %43 = vector.shape_cast %42 : vector<256x128xf32> to vector<1x16x16x128xf32>
    %c0_17 = arith.constant 0 : index
    %c0_18 = arith.constant 0 : index
    %c0_19 = arith.constant 0 : index
    %c0_20 = arith.constant 0 : index
    %44 = vector.load %arg3[%c0_17, %c0_18, %c0_19, %c0_20] : memref<1x16x16x128xf32, #tpu.memory_space<vmem>>, vector<1x16x16x128xf32>
    tpu.vector_store %arg3[%c0_17, %c0_18, %c0_19, %c0_20], %43 {strides = array<i32>} : memref<1x16x16x128xf32, #tpu.memory_space<vmem>>, vector<1x16x16x128xf32>,
    %cst_21 = arith.constant dense<0.000000e+00> : vector<128xf32>
    %45 = vector.multi_reduction <add>, %42, %cst_21 [0] : vector<256x128xf32> to vector<128xf32>
    %46 = vector.shape_cast %45 : vector<128xf32> to vector<1x128xf32>
    %47 = arith.mulf %42, %42 : vector<256x128xf32>
    %cst_22 = arith.constant dense<0.000000e+00> : vector<128xf32>
    %48 = vector.multi_reduction <add>, %47, %cst_22 [0] : vector<256x128xf32> to vector<128xf32>
    %49 = vector.shape_cast %48 : vector<128xf32> to vector<1x128xf32>
    %50 = tpu.concatenate %46, %49 in 0 : vector<1x128xf32>, vector<1x128xf32> -> vector<2x128xf32>
    %51 = vector.shape_cast %50 : vector<2x128xf32> to vector<1x2x128xf32>
    %c0_23 = arith.constant 0 : index
    %c0_24 = arith.constant 0 : index
    %c0_25 = arith.constant 0 : index
    %52 = vector.load %arg4[%c0_23, %c0_24, %c0_25] : memref<1x2x128xf32, #tpu.memory_space<vmem>>, vector<1x2x128xf32>
    tpu.vector_store %arg4[%c0_23, %c0_24, %c0_25], %51 {strides = array<i32>} : memref<1x2x128xf32, #tpu.memory_space<vmem>>, vector<1x2x128xf32>,
    return
  }
  func.func @transform_0(%arg0: i32) -> (i32, i32, i32, i32) {
    %c0_i32 = arith.constant 0 : i32
    %c0_i32_0 = arith.constant 0 : i32
    %c0_i32_1 = arith.constant 0 : i32
    %c0_i32_2 = arith.constant 0 : i32
    return %arg0, %c0_i32, %c0_i32_0, %c0_i32_1 : i32, i32, i32, i32
  }
  func.func @transform_1(%arg0: i32) -> (i32, i32) {
    %c0_i32 = arith.constant 0 : i32
    %c0_i32_0 = arith.constant 0 : i32
    %c0_i32_1 = arith.constant 0 : i32
    return %c0_i32, %c0_i32_0 : i32, i32
  }
  func.func @transform_2(%arg0: i32) -> (i32, i32, i32, i32) {
    %c0_i32 = arith.constant 0 : i32
    %c0_i32_0 = arith.constant 0 : i32
    %c0_i32_1 = arith.constant 0 : i32
    %c0_i32_2 = arith.constant 0 : i32
    return %arg0, %c0_i32, %c0_i32_0, %c0_i32_1 : i32, i32, i32, i32
  }
  func.func @transform_3(%arg0: i32) -> (i32, i32, i32) {
    %c0_i32 = arith.constant 0 : i32
    %c0_i32_0 = arith.constant 0 : i32
    %c0_i32_1 = arith.constant 0 : i32
    return %arg0, %c0_i32, %c0_i32_0 : i32, i32, i32
  }
}

</mosaic_0001>

<llo_original>
// kernel: tpu_custom_call.1
$region0: #{tpu_custom_call.1}
  #allocation0 [shape = 'u32[]', space=smem, size = 0x4, offset = 0x4, fixed_abs, tag = 'smem constant byte address 0x4 - core index']
  #allocation1 [shape = 'u32[144,128]{1,0:T(1,128)}', space=vmem, size = 0x12000, scoped, tag = 'internal scratch']
  %s0 = inlined_call_operand.hbm [shape: f32[2,16,16,64], index: 0, kind: input, shape index: {}]
  %s1 = inlined_call_operand.hbm [shape: bf16[576,128], index: 1, kind: input, shape index: {}]
  %s2 = inlined_call_operand.hbm [shape: f32[2,16,16,128], index: 2, kind: output, shape index: {0}]
  %s3 = inlined_call_operand.hbm [shape: f32[2,2,128], index: 3, kind: output, shape index: {1}]
  %4 = xla_tuple %s2, %s3
  %s5 = sld [smem:[#allocation0]]
  $region57: #{tpu_custom_call.1} parent=0
    _
  %s7 = ssub.s32 1, %s5
  %s8 = scalar_select 0, %s7, %s5
  $region1: #{tpu_custom_call.1} parent=0
    #allocation2 [shape = 'u8[262144]{0}', space=vmem, size = 0x40000, scoped, tag = 'input window, operand 0']
    #allocation3 [shape = 's32[2]{0}', space=sflag, size = 0x8, scoped, tag = 'scoped memory for tpu_custom_call.1']
    #allocation4 [shape = 's32[2]{0}', space=sflag, size = 0x8, scoped, tag = 'scoped memory for tpu_custom_call.1']
    #allocation5 [shape = 'u8[147456]{0}', space=vmem, size = 0x24000, scoped, tag = 'input window, operand 1, single buffered']
    #allocation6 [shape = 's32[1]{0}', space=sflag, size = 0x4, scoped, tag = 'scoped memory for tpu_custom_call.1']
    #allocation7 [shape = 'u8[262144]{0}', space=vmem, size = 0x40000, scoped, tag = 'output window, operand 0']
    #allocation8 [shape = 'u8[2048]{0}', space=vmem, size = 0x800, scoped, tag = 'output window, operand 1']
    #allocation9 [shape = 's32[2]{0}', space=sflag, size = 0x8, scoped, tag = 'scoped memory for tpu_custom_call.1']
    %9 = vsyncpa [#allocation3], 0
    %s10 = scalar_lea.sflag [#allocation3], 1
    %11 = vsyncpa %s10, 0
    %12 = vsyncpa [#allocation6], 0
    %13 = vsyncpa [#allocation4], 0
    %s14 = scalar_lea.sflag [#allocation4], 1
    %15 = vsyncpa %s14, 0
    %16 = vsyncpa [#allocation9], 0
    %s17 = scalar_lea.sflag [#allocation9], 1
    %18 = vsyncpa %s17, 0
    loop: start=0, step=1, limit=4
    $region2: #{tpu_custom_call.1} parent=1 // loop_pre_header
      _
    $region3: #{tpu_custom_call.1} parent=1 // loop_header
      %s20 = sphi 0, %s24
      %p21 = scmp.ge.s32.totalorder %s20, 4
      %s30 = sphi 0, %s32
      %s33 = sphi 0, %s30
      %s34 = sphi 0, %s33
      %s50 = sphi 0, %s34
      %s54 = sphi 0, %s54
      %s56 = sphi 0, %s54
      %s57 = sphi 0, %s56
      %s71 = sphi 0, %s57
      %s77 = sphi 0, %s79
      %s80 = sphi 0, %s77
      %s81 = sphi 0, %s80
      %s97 = sphi 0, %s81
      %s103 = sphi 0, %s105
      %s106 = sphi 0, %s103
      %s107 = sphi 0, %s106
      %s123 = sphi 0, %s107
    $region4: #{tpu_custom_call.1} parent=1 // loop_header_branch
      %23 = sbr.rel (%p21) target = $region8
    $region5: #{tpu_custom_call.1} parent=1 // loop_body
      %s25 = ssub.s32 %s20, 1
      %s26 = ssub.s32 %s20, 2
      %s27 = sadd.s32 %s20, 1
      %s28 = ssub.s32 %s20, %s27
      %p29 = scmp.eq.s32.totalorder %s28, 0
      %s31 = sadd.s32 %s30, 1
      %s32 = scalar_select %p29, %s30, %s31
      %p35 = pneg %p29
      %p36 = scmp.eq.s32.totalorder %s20, 1
      %p37 = por %p35, %p36
      %p38 = scmp.ne.s32.totalorder %s30, %s33
      %p39 = scmp.eq.s32.totalorder %s20, 0
      %p40 = por %p38, %p39
      %p41 = scmp.ne.s32.totalorder %s30, %s33
      %p42 = scmp.eq.s32.totalorder %s25, 1
      %p43 = por %p41, %p42
      %p44 = scmp.ne.s32.totalorder %s33, %s34
      %p45 = scmp.eq.s32.totalorder %s25, 0
      %p46 = por %p44, %p45
      %p47 = scmp.ne.s32.totalorder %s33, %s34
      %p48 = scmp.eq.s32.totalorder %s26, 1
      %p49 = por %p47, %p48
      %p51 = scmp.ne.s32.totalorder %s34, %s50
      %p52 = scmp.eq.s32.totalorder %s26, 0
      %p53 = por %p51, %p52
      %s55 = sadd.s32 %s54, 1
      %p58 = scmp.eq.s32.totalorder %s20, 1
      %p59 = scmp.ne.s32.totalorder %s54, %s56
      %p60 = scmp.eq.s32.totalorder %s20, 0
      %p61 = por %p59, %p60
      %p62 = scmp.ne.s32.totalorder %s54, %s56
      %p63 = scmp.eq.s32.totalorder %s25, 1
      %p64 = por %p62, %p63
      %p65 = scmp.ne.s32.totalorder %s56, %s57
      %p66 = scmp.eq.s32.totalorder %s25, 0
      %p67 = por %p65, %p66
      %p68 = scmp.ne.s32.totalorder %s56, %s57
      %p69 = scmp.eq.s32.totalorder %s26, 1
      %p70 = por %p68, %p69
      %p72 = scmp.ne.s32.totalorder %s57, %s71
      %p73 = scmp.eq.s32.totalorder %s26, 0
      %p74 = por %p72, %p73
      %s75 = ssub.s32 %s20, %s27
      %p76 = scmp.eq.s32.totalorder %s75, 0
      %s78 = sadd.s32 %s77, 1
      %s79 = scalar_select %p76, %s77, %s78
      %p82 = pneg %p76
      %p83 = scmp.eq.s32.totalorder %s20, 1
      %p84 = por %p82, %p83
      %p85 = scmp.ne.s32.totalorder %s77, %s80
      %p86 = scmp.eq.s32.totalorder %s20, 0
      %p87 = por %p85, %p86
      %p88 = scmp.ne.s32.totalorder %s77, %s80
      %p89 = scmp.eq.s32.totalorder %s25, 1
      %p90 = por %p88, %p89
      %p91 = scmp.ne.s32.totalorder %s80, %s81
      %p92 = scmp.eq.s32.totalorder %s25, 0
      %p93 = por %p91, %p92
      %p94 = scmp.ne.s32.totalorder %s80, %s81
      %p95 = scmp.eq.s32.totalorder %s26, 1
      %p96 = por %p94, %p95
      %p98 = scmp.ne.s32.totalorder %s81, %s97
      %p99 = scmp.eq.s32.totalorder %s26, 0
      %p100 = por %p98, %p99
      %s101 = ssub.s32 %s20, %s27
      %p102 = scmp.eq.s32.totalorder %s101, 0
      %s104 = sadd.s32 %s103, 1
      %s105 = scalar_select %p102, %s103, %s104
      %p108 = pneg %p102
      %p109 = scmp.eq.s32.totalorder %s20, 1
      %p110 = por %p108, %p109
      %p111 = scmp.ne.s32.totalorder %s103, %s106
      %p112 = scmp.eq.s32.totalorder %s20, 0
      %p113 = por %p111, %p112
      %p114 = scmp.ne.s32.totalorder %s103, %s106
      %p115 = scmp.eq.s32.totalorder %s25, 1
      %p116 = por %p114, %p115
      %p117 = scmp.ne.s32.totalorder %s106, %s107
      %p118 = scmp.eq.s32.totalorder %s25, 0
      %p119 = por %p117, %p118
      %p120 = scmp.ne.s32.totalorder %s106, %s107
      %p121 = scmp.eq.s32.totalorder %s26, 1
      %p122 = por %p120, %p121
      %p124 = scmp.ne.s32.totalorder %s107, %s123
      %p125 = scmp.eq.s32.totalorder %s26, 0
      %p126 = por %p124, %p125
      %p127 = scmp.le.s32.totalorder 1, %s20
      %p128 = scmp.lt.s32.totalorder %s20, 3
      %p129 = pnand %p127, %p128
      %p130 = pneg %p129
      // Predicated region
      $region9: #{tpu_custom_call.1} parent=5 // pred_check
        _
      $region10: #{tpu_custom_call.1} parent=5 // pred_check_branch
        %132 = sbr.rel (%p129) target = $region12
      $region11: #{tpu_custom_call.1} parent=5 // pred_region
        %s133 = ssub.s32 %s20, 1
        // Predicated region
        $region13: #{tpu_custom_call.1} parent=11 // pred_check
          %p134 = pneg %p67
        $region14: #{tpu_custom_call.1} parent=11 // pred_check_branch
          %136 = sbr.rel (%p134) target = $region16
        $region15: #{tpu_custom_call.1} parent=11 // pred_region
          %s138 = ssub.s32 4608, 4608
          %139 = vsyncadd [#allocation6], %s138
          %s140 = sshll.u32 [#allocation5], 4
          %s141 = int_to_ptr.vmem [resolvable:$true] %s140
          %146 = dma.hbm_to_vmem [thread:$0]  %s1, 4608, %s141, [#allocation6], 64, 64, 4
        $region16: #{tpu_custom_call.1} parent=11 // pred_fallthru
          _
      $region12: #{tpu_custom_call.1} parent=5 // pred_fallthru
        _
      %p147 = scmp.lt.s32.totalorder %s20, 2
      // Predicated region
      $region17: #{tpu_custom_call.1} parent=5 // pred_check
        %p148 = pneg %p147
      $region18: #{tpu_custom_call.1} parent=5 // pred_check_branch
        %150 = sbr.rel (%p148) target = $region20
      $region19: #{tpu_custom_call.1} parent=5 // pred_region
        // Predicated region
        $region21: #{tpu_custom_call.1} parent=19 // pred_check
          %p151 = pneg %p40
        $region22: #{tpu_custom_call.1} parent=19 // pred_check_branch
          %153 = sbr.rel (%p151) target = $region24
        $region23: #{tpu_custom_call.1} parent=19 // pred_region
          %s154 = sand.u32 %s30, 1
          %s155 = scalar_lea.sflag [#allocation3], %s154
          %s156 = sand.u32 %s30, 1
          %s157 = smul.addr %s156, 256
          %s158 = scalar_lea.vmem [#allocation2], %s157
          %s160 = ssub.s32 4096, 4096
          %161 = vsyncadd %s155, %s160
          %s162 = smul.addr %s20, 32
          %s163 = smul.addr %s162, 128
          %s164 = scalar_lea.hbm %s0, %s163
          %s165 = sshll.u32 %s158, 4
          %s166 = int_to_ptr.vmem [resolvable:$true] %s165
          %171 = dma.hbm_to_vmem [thread:$0]  %s164, 4096, %s166, %s155, 128, 128, 8
        $region24: #{tpu_custom_call.1} parent=19 // pred_fallthru
          _
      $region20: #{tpu_custom_call.1} parent=5 // pred_fallthru
        _
      %p172 = scmp.le.s32.totalorder 1, %s20
      %p173 = scmp.lt.s32.totalorder %s20, 3
      %p174 = pnand %p172, %p173
      %p175 = pneg %p174
      // Predicated region
      $region25: #{tpu_custom_call.1} parent=5 // pred_check
        _
      $region26: #{tpu_custom_call.1} parent=5 // pred_check_branch
        %177 = sbr.rel (%p174) target = $region28
      $region27: #{tpu_custom_call.1} parent=5 // pred_region
        %s178 = ssub.s32 %s20, 1
        %s179 = sand.u32 %s33, 1
        %s180 = scalar_lea.sflag [#allocation3], %s179
        %s181 = sand.u32 %s33, 1
        %s182 = smul.addr %s181, 256
        %s183 = scalar_lea.vmem [#allocation2], %s182
        // Predicated region
        $region29: #{tpu_custom_call.1} parent=27 // pred_check
          %p184 = pneg %p46
        $region30: #{tpu_custom_call.1} parent=27 // pred_check_branch
          %186 = sbr.rel (%p184) target = $region32
        $region31: #{tpu_custom_call.1} parent=27 // pred_region
          %187 = dma.done %s180, 4096
        $region32: #{tpu_custom_call.1} parent=27 // pred_fallthru
          _
        // Predicated region
        $region33: #{tpu_custom_call.1} parent=27 // pred_check
          %p188 = pneg %p67
        $region34: #{tpu_custom_call.1} parent=27 // pred_check_branch
          %190 = sbr.rel (%p188) target = $region36
        $region35: #{tpu_custom_call.1} parent=27 // pred_region
          %191 = dma.done [#allocation6], 4608
        $region36: #{tpu_custom_call.1} parent=27 // pred_fallthru
          _
        %s192 = sand.u32 %s33, 1
        %s193 = scalar_lea.sflag [#allocation3], %s192
        %s194 = sand.u32 %s33, 1
        %s195 = smul.addr %s194, 256
        %s196 = scalar_lea.vmem [#allocation2], %s195
        %p197 = pneg %p46
        %p198 = pneg %p43
        %p199 = pneg %p67
        %p200 = pneg %p64
        %p201 = pneg %p93
        %p202 = pneg %p90
        %s203 = sand.u32 %s80, 1
        %s204 = scalar_lea.sflag [#allocation4], %s203
        %s205 = sand.u32 %s80, 1
        %s206 = smul.addr %s205, 256
        %s207 = scalar_lea.vmem [#allocation7], %s206
        %p208 = pneg %p119
        %p209 = pneg %p116
        %s210 = sand.u32 %s106, 1
        %s211 = scalar_lea.sflag [#allocation9], %s210
        %s212 = sand.u32 %s106, 1
        %s213 = smul.addr %s212, 2
        %s214 = scalar_lea.vmem [#allocation8], %s213
        %v216 = vld [vmem:[%s183] sm:$0xff]
        %v217 = vld [vmem:[%s183 + $0x8] sm:$0xff]
        %v218 = vld [vmem:[%s183 + $0x10] sm:$0xff]
        %v219 = vld [vmem:[%s183 + $0x18] sm:$0xff]
        %v220 = vld [vmem:[%s183 + $0x20] sm:$0xff]
        %v221 = vld [vmem:[%s183 + $0x28] sm:$0xff]
        %v222 = vld [vmem:[%s183 + $0x30] sm:$0xff]
        %v223 = vld [vmem:[%s183 + $0x38] sm:$0xff]
        %v224 = vld [vmem:[%s183 + $0x40] sm:$0xff]
        %v225 = vld [vmem:[%s183 + $0x48] sm:$0xff]
        %v226 = vld [vmem:[%s183 + $0x50] sm:$0xff]
        %v227 = vld [vmem:[%s183 + $0x58] sm:$0xff]
        %v228 = vld [vmem:[%s183 + $0x60] sm:$0xff]
        %v229 = vld [vmem:[%s183 + $0x68] sm:$0xff]
        %v230 = vld [vmem:[%s183 + $0x70] sm:$0xff]
        %v231 = vld [vmem:[%s183 + $0x78] sm:$0xff]
        %v232 = vld [vmem:[%s183 + $0x80] sm:$0xff]
        %v233 = vld [vmem:[%s183 + $0x88] sm:$0xff]
        %v234 = vld [vmem:[%s183 + $0x90] sm:$0xff]
        %v235 = vld [vmem:[%s183 + $0x98] sm:$0xff]
        %v236 = vld [vmem:[%s183 + $0xa0] sm:$0xff]
        %v237 = vld [vmem:[%s183 + $0xa8] sm:$0xff]
        %v238 = vld [vmem:[%s183 + $0xb0] sm:$0xff]
        %v239 = vld [vmem:[%s183 + $0xb8] sm:$0xff]
        %v240 = vld [vmem:[%s183 + $0xc0] sm:$0xff]
        %v241 = vld [vmem:[%s183 + $0xc8] sm:$0xff]
        %v242 = vld [vmem:[%s183 + $0xd0] sm:$0xff]
        %v243 = vld [vmem:[%s183 + $0xd8] sm:$0xff]
        %v244 = vld [vmem:[%s183 + $0xe0] sm:$0xff]
        %v245 = vld [vmem:[%s183 + $0xe8] sm:$0xff]
        %v246 = vld [vmem:[%s183 + $0xf0] sm:$0xff]
        %v247 = vld [vmem:[%s183 + $0xf8] sm:$0xff]
        %vm279 = vcmask 1040384
        %v280 = vrot.slane 0.0, 7
        %v281 = vsel %vm279, %v280, %v280
        %v282 = vrot.slane %v216, 7
        %v283 = vrot.slane %v217, 7
        %v284 = vsel %vm279, %v282, %v283
        %v285 = vrot.slane %v218, 7
        %v286 = vrot.slane %v219, 7
        %v287 = vsel %vm279, %v285, %v286
        %v288 = vrot.slane %v220, 7
        %v289 = vrot.slane %v221, 7
        %v290 = vsel %vm279, %v288, %v289
        %v291 = vrot.slane %v222, 7
        %v292 = vrot.slane %v223, 7
        %v293 = vsel %vm279, %v291, %v292
        %v294 = vrot.slane %v224, 7
        %v295 = vrot.slane %v225, 7
        %v296 = vsel %vm279, %v294, %v295
        %v297 = vrot.slane %v226, 7
        %v298 = vrot.slane %v227, 7
        %v299 = vsel %vm279, %v297, %v298
        %v300 = vrot.slane %v228, 7
        %v301 = vrot.slane %v229, 7
        %v302 = vsel %vm279, %v300, %v301
        %v303 = vrot.slane %v230, 7
        %v304 = vrot.slane %v231, 7
        %v305 = vsel %vm279, %v303, %v304
        %v306 = vrot.slane %v232, 7
        %v307 = vrot.slane %v233, 7
        %v308 = vsel %vm279, %v306, %v307
        %v309 = vrot.slane %v234, 7
        %v310 = vrot.slane %v235, 7
        %v311 = vsel %vm279, %v309, %v310
        %v312 = vrot.slane %v236, 7
        %v313 = vrot.slane %v237, 7
        %v314 = vsel %vm279, %v312, %v313
        %v315 = vrot.slane %v238, 7
        %v316 = vrot.slane %v239, 7
        %v317 = vsel %vm279, %v315, %v316
        %v318 = vrot.slane %v240, 7
        %v319 = vrot.slane %v241, 7
        %v320 = vsel %vm279, %v318, %v319
        %v321 = vrot.slane %v242, 7
        %v322 = vrot.slane %v243, 7
        %v323 = vsel %vm279, %v321, %v322
        %v324 = vrot.slane %v244, 7
        %v325 = vrot.slane %v245, 7
        %v326 = vsel %vm279, %v324, %v325
        %v359 = vsel %vm279, 0.0, %v280
        %v360 = vsel %vm279, 0.0, %v282
        %v361 = vsel %vm279, 0.0, %v285
        %v362 = vsel %vm279, 0.0, %v288
        %v363 = vsel %vm279, 0.0, %v291
        %v364 = vsel %vm279, 0.0, %v294
        %v365 = vsel %vm279, 0.0, %v297
        %v366 = vsel %vm279, 0.0, %v300
        %v367 = vsel %vm279, 0.0, %v303
        %v368 = vsel %vm279, 0.0, %v306
        %v369 = vsel %vm279, 0.0, %v309
        %v370 = vsel %vm279, 0.0, %v312
        %v371 = vsel %vm279, 0.0, %v315
        %v372 = vsel %vm279, 0.0, %v318
        %v373 = vsel %vm279, 0.0, %v321
        %v374 = vsel %vm279, 0.0, %v324
        %vm375 = vcmask 1046528
        %v376 = vrot.slane 0.0, 1
        %v377 = vsel %vm375, %v376, %v376
        %v378 = vrot.slane %v216, 1
        %v379 = vrot.slane %v217, 1
        %v380 = vsel %vm375, %v378, %v379
        %v381 = vrot.slane %v218, 1
        %v382 = vrot.slane %v219, 1
        %v383 = vsel %vm375, %v381, %v382
        %v384 = vrot.slane %v220, 1
        %v385 = vrot.slane %v221, 1
        %v386 = vsel %vm375, %v384, %v385
        %v387 = vrot.slane %v222, 1
        %v388 = vrot.slane %v223, 1
        %v389 = vsel %vm375, %v387, %v388
        %v390 = vrot.slane %v224, 1
        %v391 = vrot.slane %v225, 1
        %v392 = vsel %vm375, %v390, %v391
        %v393 = vrot.slane %v226, 1
        %v394 = vrot.slane %v227, 1
        %v395 = vsel %vm375, %v393, %v394
        %v396 = vrot.slane %v228, 1
        %v397 = vrot.slane %v229, 1
        %v398 = vsel %vm375, %v396, %v397
        %v399 = vrot.slane %v230, 1
        %v400 = vrot.slane %v231, 1
        %v401 = vsel %vm375, %v399, %v400
        %v402 = vrot.slane %v232, 1
        %v403 = vrot.slane %v233, 1
        %v404 = vsel %vm375, %v402, %v403
        %v405 = vrot.slane %v234, 1
        %v406 = vrot.slane %v235, 1
        %v407 = vsel %vm375, %v405, %v406
        %v408 = vrot.slane %v236, 1
        %v409 = vrot.slane %v237, 1
        %v410 = vsel %vm375, %v408, %v409
        %v411 = vrot.slane %v238, 1
        %v412 = vrot.slane %v239, 1
        %v413 = vsel %vm375, %v411, %v412
        %v414 = vrot.slane %v240, 1
        %v415 = vrot.slane %v241, 1
        %v416 = vsel %vm375, %v414, %v415
        %v417 = vrot.slane %v242, 1
        %v418 = vrot.slane %v243, 1
        %v419 = vsel %vm375, %v417, %v418
        %v420 = vrot.slane %v244, 1
        %v421 = vrot.slane %v245, 1
        %v422 = vsel %vm375, %v420, %v421
        %v455 = vsel %vm375, %v376, 0.0
        %v456 = vsel %vm375, %v379, 0.0
        %v457 = vsel %vm375, %v382, 0.0
        %v458 = vsel %vm375, %v385, 0.0
        %v459 = vsel %vm375, %v388, 0.0
        %v460 = vsel %vm375, %v391, 0.0
        %v461 = vsel %vm375, %v394, 0.0
        %v462 = vsel %vm375, %v397, 0.0
        %v463 = vsel %vm375, %v400, 0.0
        %v464 = vsel %vm375, %v403, 0.0
        %v465 = vsel %vm375, %v406, 0.0
        %v466 = vsel %vm375, %v409, 0.0
        %v467 = vsel %vm375, %v412, 0.0
        %v468 = vsel %vm375, %v415, 0.0
        %v469 = vsel %vm375, %v418, 0.0
        %v470 = vsel %vm375, %v421, 0.0
        %v473 = vrot.slane %v246, 7
        %v474 = vrot.slane %v247, 7
        %v475 = vsel %vm279, %v473, %v474
        %v477 = vsel %vm279, 0.0, %v473
        %v478 = vrot.slane %v246, 1
        %v479 = vrot.slane %v247, 1
        %v480 = vsel %vm375, %v478, %v479
        %v482 = vsel %vm375, %v479, 0.0
        %485 = vrot.lane.b32.xlu0 0.0, 64
        %v486 = vpop.permute.xlu0 %485
        %487 = vrot.lane.b32.xlu0 %v216, 64
        %v488 = vpop.permute.xlu0 %487
        %489 = vrot.lane.b32.xlu0 %v217, 64
        %v490 = vpop.permute.xlu0 %489
        %491 = vrot.lane.b32.xlu0 %v218, 64
        %v492 = vpop.permute.xlu0 %491
        %493 = vrot.lane.b32.xlu0 %v219, 64
        %v494 = vpop.permute.xlu0 %493
        %495 = vrot.lane.b32.xlu0 %v220, 64
        %v496 = vpop.permute.xlu0 %495
        %497 = vrot.lane.b32.xlu0 %v221, 64
        %v498 = vpop.permute.xlu0 %497
        %499 = vrot.lane.b32.xlu0 %v222, 64
        %v500 = vpop.permute.xlu0 %499
        %501 = vrot.lane.b32.xlu0 %v223, 64
        %v502 = vpop.permute.xlu0 %501
        %503 = vrot.lane.b32.xlu0 %v224, 64
        %v504 = vpop.permute.xlu0 %503
        %505 = vrot.lane.b32.xlu0 %v225, 64
        %v506 = vpop.permute.xlu0 %505
        %507 = vrot.lane.b32.xlu0 %v226, 64
        %v508 = vpop.permute.xlu0 %507
        %509 = vrot.lane.b32.xlu0 %v227, 64
        %v510 = vpop.permute.xlu0 %509
        %511 = vrot.lane.b32.xlu0 %v228, 64
        %v512 = vpop.permute.xlu0 %511
        %513 = vrot.lane.b32.xlu0 %v229, 64
        %v514 = vpop.permute.xlu0 %513
        %515 = vrot.lane.b32.xlu0 %v230, 64
        %v516 = vpop.permute.xlu0 %515
        %517 = vrot.lane.b32.xlu0 %v231, 64
        %v518 = vpop.permute.xlu0 %517
        %519 = vrot.lane.b32.xlu0 %v232, 64
        %v520 = vpop.permute.xlu0 %519
        %521 = vrot.lane.b32.xlu0 %v233, 64
        %v522 = vpop.permute.xlu0 %521
        %523 = vrot.lane.b32.xlu0 %v234, 64
        %v524 = vpop.permute.xlu0 %523
        %525 = vrot.lane.b32.xlu0 %v235, 64
        %v526 = vpop.permute.xlu0 %525
        %527 = vrot.lane.b32.xlu0 %v236, 64
        %v528 = vpop.permute.xlu0 %527
        %529 = vrot.lane.b32.xlu0 %v237, 64
        %v530 = vpop.permute.xlu0 %529
        %531 = vrot.lane.b32.xlu0 %v238, 64
        %v532 = vpop.permute.xlu0 %531
        %533 = vrot.lane.b32.xlu0 %v239, 64
        %v534 = vpop.permute.xlu0 %533
        %535 = vrot.lane.b32.xlu0 %v240, 64
        %v536 = vpop.permute.xlu0 %535
        %537 = vrot.lane.b32.xlu0 %v241, 64
        %v538 = vpop.permute.xlu0 %537
        %539 = vrot.lane.b32.xlu0 %v242, 64
        %v540 = vpop.permute.xlu0 %539
        %541 = vrot.lane.b32.xlu0 %v243, 64
        %v542 = vpop.permute.xlu0 %541
        %543 = vrot.lane.b32.xlu0 %v244, 64
        %v544 = vpop.permute.xlu0 %543
        %545 = vrot.lane.b32.xlu0 %v245, 64
        %v546 = vpop.permute.xlu0 %545
        %594 = vrot.lane.b32.xlu0 %v360, 64
        %v595 = vpop.permute.xlu0 %594
        %596 = vrot.lane.b32.xlu0 %v284, 64
        %v597 = vpop.permute.xlu0 %596
        %598 = vrot.lane.b32.xlu0 %v361, 64
        %v599 = vpop.permute.xlu0 %598
        %600 = vrot.lane.b32.xlu0 %v287, 64
        %v601 = vpop.permute.xlu0 %600
        %602 = vrot.lane.b32.xlu0 %v362, 64
        %v603 = vpop.permute.xlu0 %602
        %604 = vrot.lane.b32.xlu0 %v290, 64
        %v605 = vpop.permute.xlu0 %604
        %606 = vrot.lane.b32.xlu0 %v363, 64
        %v607 = vpop.permute.xlu0 %606
        %608 = vrot.lane.b32.xlu0 %v293, 64
        %v609 = vpop.permute.xlu0 %608
        %610 = vrot.lane.b32.xlu0 %v364, 64
        %v611 = vpop.permute.xlu0 %610
        %612 = vrot.lane.b32.xlu0 %v296, 64
        %v613 = vpop.permute.xlu0 %612
        %614 = vrot.lane.b32.xlu0 %v365, 64
        %v615 = vpop.permute.xlu0 %614
        %616 = vrot.lane.b32.xlu0 %v299, 64
        %v617 = vpop.permute.xlu0 %616
        %618 = vrot.lane.b32.xlu0 %v366, 64
        %v619 = vpop.permute.xlu0 %618
        %620 = vrot.lane.b32.xlu0 %v302, 64
        %v621 = vpop.permute.xlu0 %620
        %622 = vrot.lane.b32.xlu0 %v367, 64
        %v623 = vpop.permute.xlu0 %622
        %624 = vrot.lane.b32.xlu0 %v305, 64
        %v625 = vpop.permute.xlu0 %624
        %626 = vrot.lane.b32.xlu0 %v368, 64
        %v627 = vpop.permute.xlu0 %626
        %628 = vrot.lane.b32.xlu0 %v308, 64
        %v629 = vpop.permute.xlu0 %628
        %630 = vrot.lane.b32.xlu0 %v369, 64
        %v631 = vpop.permute.xlu0 %630
        %632 = vrot.lane.b32.xlu0 %v311, 64
        %v633 = vpop.permute.xlu0 %632
        %634 = vrot.lane.b32.xlu0 %v370, 64
        %v635 = vpop.permute.xlu0 %634
        %636 = vrot.lane.b32.xlu0 %v314, 64
        %v637 = vpop.permute.xlu0 %636
        %638 = vrot.lane.b32.xlu0 %v371, 64
        %v639 = vpop.permute.xlu0 %638
        %640 = vrot.lane.b32.xlu0 %v317, 64
        %v641 = vpop.permute.xlu0 %640
        %642 = vrot.lane.b32.xlu0 %v372, 64
        %v643 = vpop.permute.xlu0 %642
        %644 = vrot.lane.b32.xlu0 %v320, 64
        %v645 = vpop.permute.xlu0 %644
        %646 = vrot.lane.b32.xlu0 %v373, 64
        %v647 = vpop.permute.xlu0 %646
        %648 = vrot.lane.b32.xlu0 %v323, 64
        %v649 = vpop.permute.xlu0 %648
        %650 = vrot.lane.b32.xlu0 %v374, 64
        %v651 = vpop.permute.xlu0 %650
        %652 = vrot.lane.b32.xlu0 %v326, 64
        %v653 = vpop.permute.xlu0 %652
        %654 = vrot.lane.b32.xlu0 %v477, 64
        %v655 = vpop.permute.xlu0 %654
        %656 = vrot.lane.b32.xlu0 %v475, 64
        %v657 = vpop.permute.xlu0 %656
        %706 = vrot.lane.b32.xlu0 %v380, 64
        %v707 = vpop.permute.xlu0 %706
        %708 = vrot.lane.b32.xlu0 %v456, 64
        %v709 = vpop.permute.xlu0 %708
        %710 = vrot.lane.b32.xlu0 %v383, 64
        %v711 = vpop.permute.xlu0 %710
        %712 = vrot.lane.b32.xlu0 %v457, 64
        %v713 = vpop.permute.xlu0 %712
        %714 = vrot.lane.b32.xlu0 %v386, 64
        %v715 = vpop.permute.xlu0 %714
        %716 = vrot.lane.b32.xlu0 %v458, 64
        %v717 = vpop.permute.xlu0 %716
        %718 = vrot.lane.b32.xlu0 %v389, 64
        %v719 = vpop.permute.xlu0 %718
        %720 = vrot.lane.b32.xlu0 %v459, 64
        %v721 = vpop.permute.xlu0 %720
        %722 = vrot.lane.b32.xlu0 %v392, 64
        %v723 = vpop.permute.xlu0 %722
        %724 = vrot.lane.b32.xlu0 %v460, 64
        %v725 = vpop.permute.xlu0 %724
        %726 = vrot.lane.b32.xlu0 %v395, 64
        %v727 = vpop.permute.xlu0 %726
        %728 = vrot.lane.b32.xlu0 %v461, 64
        %v729 = vpop.permute.xlu0 %728
        %730 = vrot.lane.b32.xlu0 %v398, 64
        %v731 = vpop.permute.xlu0 %730
        %732 = vrot.lane.b32.xlu0 %v462, 64
        %v733 = vpop.permute.xlu0 %732
        %734 = vrot.lane.b32.xlu0 %v401, 64
        %v735 = vpop.permute.xlu0 %734
        %736 = vrot.lane.b32.xlu0 %v463, 64
        %v737 = vpop.permute.xlu0 %736
        %738 = vrot.lane.b32.xlu0 %v404, 64
        %v739 = vpop.permute.xlu0 %738
        %740 = vrot.lane.b32.xlu0 %v464, 64
        %v741 = vpop.permute.xlu0 %740
        %742 = vrot.lane.b32.xlu0 %v407, 64
        %v743 = vpop.permute.xlu0 %742
        %744 = vrot.lane.b32.xlu0 %v465, 64
        %v745 = vpop.permute.xlu0 %744
        %746 = vrot.lane.b32.xlu0 %v410, 64
        %v747 = vpop.permute.xlu0 %746
        %748 = vrot.lane.b32.xlu0 %v466, 64
        %v749 = vpop.permute.xlu0 %748
        %750 = vrot.lane.b32.xlu0 %v413, 64
        %v751 = vpop.permute.xlu0 %750
        %752 = vrot.lane.b32.xlu0 %v467, 64
        %v753 = vpop.permute.xlu0 %752
        %754 = vrot.lane.b32.xlu0 %v416, 64
        %v755 = vpop.permute.xlu0 %754
        %756 = vrot.lane.b32.xlu0 %v468, 64
        %v757 = vpop.permute.xlu0 %756
        %758 = vrot.lane.b32.xlu0 %v419, 64
        %v759 = vpop.permute.xlu0 %758
        %760 = vrot.lane.b32.xlu0 %v469, 64
        %v761 = vpop.permute.xlu0 %760
        %762 = vrot.lane.b32.xlu0 %v422, 64
        %v763 = vpop.permute.xlu0 %762
        %764 = vrot.lane.b32.xlu0 %v470, 64
        %v765 = vpop.permute.xlu0 %764
        %766 = vrot.lane.b32.xlu0 %v480, 64
        %v767 = vpop.permute.xlu0 %766
        %768 = vrot.lane.b32.xlu0 %v482, 64
        %v769 = vpop.permute.xlu0 %768
        %802 = vrot.lane.b32.xlu0 %v246, 64
        %v803 = vpop.permute.xlu0 %802
        %804 = vrot.lane.b32.xlu0 %v247, 64
        %v805 = vpop.permute.xlu0 %804
        %vm808 = vcmask 523264
        %v809 = vsel %vm808, %v359, %v486
        %v810 = vsel %vm808, %v281, %v486
        %v811 = vsel %vm808, %v360, %v488
        %v812 = vsel %vm808, %v284, %v490
        %v813 = vsel %vm808, %v361, %v492
        %v814 = vsel %vm808, %v287, %v494
        %v815 = vsel %vm808, %v362, %v496
        %v816 = vsel %vm808, %v290, %v498
        %v817 = vsel %vm808, %v363, %v500
        %v818 = vsel %vm808, %v293, %v502
        %v819 = vsel %vm808, %v364, %v504
        %v820 = vsel %vm808, %v296, %v506
        %v821 = vsel %vm808, %v365, %v508
        %v822 = vsel %vm808, %v299, %v510
        %v823 = vsel %vm808, %v366, %v512
        %v824 = vsel %vm808, %v302, %v514
        %v825 = vsel %vm808, %v367, %v516
        %v826 = vsel %vm808, %v305, %v518
        %v827 = vsel %vm808, %v368, %v520
        %v828 = vsel %vm808, %v308, %v522
        %v829 = vsel %vm808, %v369, %v524
        %v830 = vsel %vm808, %v311, %v526
        %v831 = vsel %vm808, %v370, %v528
        %v832 = vsel %vm808, %v314, %v530
        %v833 = vsel %vm808, %v371, %v532
        %v834 = vsel %vm808, %v317, %v534
        %v835 = vsel %vm808, %v372, %v536
        %v836 = vsel %vm808, %v320, %v538
        %v837 = vsel %vm808, %v373, %v540
        %v838 = vsel %vm808, %v323, %v542
        %v839 = vsel %vm808, %v374, %v544
        %v840 = vsel %vm808, %v326, %v546
        %v841 = vsel %vm808, %v377, %v595
        %v842 = vsel %vm808, %v455, %v597
        %v843 = vsel %vm808, %v380, %v599
        %v844 = vsel %vm808, %v456, %v601
        %v845 = vsel %vm808, %v383, %v603
        %v846 = vsel %vm808, %v457, %v605
        %v847 = vsel %vm808, %v386, %v607
        %v848 = vsel %vm808, %v458, %v609
        %v849 = vsel %vm808, %v389, %v611
        %v850 = vsel %vm808, %v459, %v613
        %v851 = vsel %vm808, %v392, %v615
        %v852 = vsel %vm808, %v460, %v617
        %v853 = vsel %vm808, %v395, %v619
        %v854 = vsel %vm808, %v461, %v621
        %v855 = vsel %vm808, %v398, %v623
        %v856 = vsel %vm808, %v462, %v625
        %v857 = vsel %vm808, %v401, %v627
        %v858 = vsel %vm808, %v463, %v629
        %v859 = vsel %vm808, %v404, %v631
        %v860 = vsel %vm808, %v464, %v633
        %v861 = vsel %vm808, %v407, %v635
        %v862 = vsel %vm808, %v465, %v637
        %v863 = vsel %vm808, %v410, %v639
        %v864 = vsel %vm808, %v466, %v641
        %v865 = vsel %vm808, %v413, %v643
        %v866 = vsel %vm808, %v467, %v645
        %v867 = vsel %vm808, %v416, %v647
        %v868 = vsel %vm808, %v468, %v649
        %v869 = vsel %vm808, %v419, %v651
        %v870 = vsel %vm808, %v469, %v653
        %v871 = vsel %vm808, %v422, %v655
        %v872 = vsel %vm808, %v470, %v657
        %v873 = vsel %vm808, %v216, %v707
        %v874 = vsel %vm808, %v217, %v709
        %v875 = vsel %vm808, %v218, %v711
        %v876 = vsel %vm808, %v219, %v713
        %v877 = vsel %vm808, %v220, %v715
        %v878 = vsel %vm808, %v221, %v717
        %v879 = vsel %vm808, %v222, %v719
        %v880 = vsel %vm808, %v223, %v721
        %v881 = vsel %vm808, %v224, %v723
        %v882 = vsel %vm808, %v225, %v725
        %v883 = vsel %vm808, %v226, %v727
        %v884 = vsel %vm808, %v227, %v729
        %v885 = vsel %vm808, %v228, %v731
        %v886 = vsel %vm808, %v229, %v733
        %v887 = vsel %vm808, %v230, %v735
        %v888 = vsel %vm808, %v231, %v737
        %v889 = vsel %vm808, %v232, %v739
        %v890 = vsel %vm808, %v233, %v741
        %v891 = vsel %vm808, %v234, %v743
        %v892 = vsel %vm808, %v235, %v745
        %v893 = vsel %vm808, %v236, %v747
        %v894 = vsel %vm808, %v237, %v749
        %v895 = vsel %vm808, %v238, %v751
        %v896 = vsel %vm808, %v239, %v753
        %v897 = vsel %vm808, %v240, %v755
        %v898 = vsel %vm808, %v241, %v757
        %v899 = vsel %vm808, %v242, %v759
        %v900 = vsel %vm808, %v243, %v761
        %v901 = vsel %vm808, %v244, %v763
        %v902 = vsel %vm808, %v245, %v765
        %v903 = vsel %vm808, %v246, %v767
        %v904 = vsel %vm808, %v247, %v769
        %v905 = vsel %vm808, %v477, %v803
        %v906 = vsel %vm808, %v475, %v805
        %v907 = vpack.c.bf16 %v810, %v809
        %v908 = vpack.c.bf16 %v842, %v841
        %v909 = vpack.c.bf16 %v874, %v873
        %v910 = vpack.c.bf16 %v814, %v813
        %v911 = vpack.c.bf16 %v457, %v383
        %v912 = vpack.c.bf16 %v812, %v811
        %v913 = vpack.c.bf16 %v844, %v843
        %v914 = vpack.c.bf16 %v876, %v875
        %v915 = vpack.c.bf16 %v816, %v815
        %v916 = vpack.c.bf16 %v458, %v386
        %v917 = vpack.c.bf16 %v846, %v845
        %v918 = vpack.c.bf16 %v878, %v877
        %v919 = vpack.c.bf16 %v818, %v817
        %v920 = vpack.c.bf16 %v459, %v389
        %v921 = vpack.c.bf16 %v848, %v847
        %v922 = vpack.c.bf16 %v880, %v879
        %v923 = vpack.c.bf16 %v820, %v819
        %v924 = vpack.c.bf16 %v460, %v392
        %v925 = vpack.c.bf16 %v850, %v849
        %v926 = vpack.c.bf16 %v882, %v881
        %v927 = vpack.c.bf16 %v822, %v821
        %v928 = vpack.c.bf16 %v461, %v395
        %v929 = vpack.c.bf16 %v852, %v851
        %v930 = vpack.c.bf16 %v884, %v883
        %v931 = vpack.c.bf16 %v824, %v823
        %v932 = vpack.c.bf16 %v462, %v398
        %v933 = vpack.c.bf16 %v854, %v853
        %v934 = vpack.c.bf16 %v886, %v885
        %v935 = vpack.c.bf16 %v826, %v825
        %v936 = vpack.c.bf16 %v463, %v401
        %v937 = vpack.c.bf16 %v856, %v855
        %v938 = vpack.c.bf16 %v888, %v887
        %v939 = vpack.c.bf16 %v828, %v827
        %v940 = vpack.c.bf16 %v464, %v404
        %v941 = vpack.c.bf16 %v858, %v857
        %v942 = vpack.c.bf16 %v890, %v889
        %v943 = vpack.c.bf16 %v830, %v829
        %v944 = vpack.c.bf16 %v465, %v407
        %v945 = vpack.c.bf16 %v860, %v859
        %v946 = vpack.c.bf16 %v892, %v891
        %v947 = vpack.c.bf16 %v832, %v831
        %v948 = vpack.c.bf16 %v466, %v410
        %v949 = vpack.c.bf16 %v862, %v861
        %v950 = vpack.c.bf16 %v894, %v893
        %v951 = vpack.c.bf16 %v834, %v833
        %v952 = vpack.c.bf16 %v467, %v413
        %v953 = vpack.c.bf16 %v864, %v863
        %v954 = vpack.c.bf16 %v896, %v895
        %v955 = vpack.c.bf16 %v836, %v835
        %v956 = vpack.c.bf16 %v468, %v416
        %v957 = vpack.c.bf16 %v866, %v865
        %v958 = vpack.c.bf16 %v898, %v897
        %v959 = vpack.c.bf16 %v838, %v837
        %v960 = vpack.c.bf16 %v469, %v419
        %v961 = vpack.c.bf16 %v868, %v867
        %v962 = vpack.c.bf16 %v900, %v899
        %v963 = vpack.c.bf16 %v840, %v839
        %v964 = vpack.c.bf16 %v470, %v422
        %v965 = vpack.c.bf16 %v870, %v869
        %v966 = vpack.c.bf16 %v902, %v901
        %v967 = vpack.c.bf16 %v906, %v905
        %v968 = vpack.c.bf16 %v482, %v480
        %v969 = vpack.c.bf16 %v872, %v871
        %v970 = vpack.c.bf16 %v904, %v903
        %v971 = vpack.c.bf16 %v455, %v377
        %v972 = vld [vmem:[#allocation5] sm:$0xf]
        %v973 = vld [vmem:[#allocation5 + $0x4] sm:$0xf]
        %v974 = vld [vmem:[#allocation5 + $0x8] sm:$0xf]
        %v975 = vld [vmem:[#allocation5 + $0xc] sm:$0xf]
        %v976 = vld [vmem:[#allocation5 + $0x10] sm:$0xf]
        %v977 = vld [vmem:[#allocation5 + $0x14] sm:$0xf]
        %v978 = vld [vmem:[#allocation5 + $0x18] sm:$0xf]
        %v979 = vld [vmem:[#allocation5 + $0x1c] sm:$0xf]
        %v980 = vld [vmem:[#allocation5 + $0x20] sm:$0xf]
        %v981 = vld [vmem:[#allocation5 + $0x24] sm:$0xf]
        %v982 = vld [vmem:[#allocation5 + $0x28] sm:$0xf]
        %v983 = vld [vmem:[#allocation5 + $0x2c] sm:$0xf]
        %v984 = vld [vmem:[#allocation5 + $0x30] sm:$0xf]
        %v985 = vld [vmem:[#allocation5 + $0x34] sm:$0xf]
        %v986 = vld [vmem:[#allocation5 + $0x38] sm:$0xf]
        %v987 = vld [vmem:[#allocation5 + $0x3c] sm:$0xf]
        %v988 = vld [vmem:[#allocation5 + $0x40] sm:$0xf]
        %v989 = vld [vmem:[#allocation5 + $0x44] sm:$0xf]
        %v990 = vld [vmem:[#allocation5 + $0x48] sm:$0xf]
        %v991 = vld [vmem:[#allocation5 + $0x4c] sm:$0xf]
        %v992 = vld [vmem:[#allocation5 + $0x50] sm:$0xf]
        %v993 = vld [vmem:[#allocation5 + $0x54] sm:$0xf]
        %v994 = vld [vmem:[#allocation5 + $0x58] sm:$0xf]
        %v995 = vld [vmem:[#allocation5 + $0x5c] sm:$0xf]
        %v996 = vld [vmem:[#allocation5 + $0x60] sm:$0xf]
        %v997 = vld [vmem:[#allocation5 + $0x64] sm:$0xf]
        %v998 = vld [vmem:[#allocation5 + $0x68] sm:$0xf]
        %v999 = vld [vmem:[#allocation5 + $0x6c] sm:$0xf]
        %v1000 = vld [vmem:[#allocation5 + $0x70] sm:$0xf]
        %v1001 = vld [vmem:[#allocation5 + $0x74] sm:$0xf]
        %v1002 = vld [vmem:[#allocation5 + $0x78] sm:$0xf]
        %v1003 = vld [vmem:[#allocation5 + $0x7c] sm:$0xf]
        %v1004 = vld [vmem:[#allocation5 + $0x80] sm:$0xf]
        %v1005 = vld [vmem:[#allocation5 + $0x84] sm:$0xf]
        %v1006 = vld [vmem:[#allocation5 + $0x88] sm:$0xf]
        %v1007 = vld [vmem:[#allocation5 + $0x8c] sm:$0xf]
        %v1008 = vld [vmem:[#allocation5 + $0x90] sm:$0xf]
        %v1009 = vld [vmem:[#allocation5 + $0x94] sm:$0xf]
        %v1010 = vld [vmem:[#allocation5 + $0x98] sm:$0xf]
        %v1011 = vld [vmem:[#allocation5 + $0x9c] sm:$0xf]
        %v1012 = vld [vmem:[#allocation5 + $0xa0] sm:$0xf]
        %v1013 = vld [vmem:[#allocation5 + $0xa4] sm:$0xf]
        %v1014 = vld [vmem:[#allocation5 + $0xa8] sm:$0xf]
        %v1015 = vld [vmem:[#allocation5 + $0xac] sm:$0xf]
        %v1016 = vld [vmem:[#allocation5 + $0xb0] sm:$0xf]
        %v1017 = vld [vmem:[#allocation5 + $0xb4] sm:$0xf]
        %v1018 = vld [vmem:[#allocation5 + $0xb8] sm:$0xf]
        %v1019 = vld [vmem:[#allocation5 + $0xbc] sm:$0xf]
        %v1020 = vld [vmem:[#allocation5 + $0xc0] sm:$0xf]
        %v1021 = vld [vmem:[#allocation5 + $0xc4] sm:$0xf]
        %v1022 = vld [vmem:[#allocation5 + $0xc8] sm:$0xf]
        %v1023 = vld [vmem:[#allocation5 + $0xcc] sm:$0xf]
        %v1024 = vld [vmem:[#allocation5 + $0xd0] sm:$0xf]
        %v1025 = vld [vmem:[#allocation5 + $0xd4] sm:$0xf]
        %v1026 = vld [vmem:[#allocation5 + $0xd8] sm:$0xf]
        %v1027 = vld [vmem:[#allocation5 + $0xdc] sm:$0xf]
        %v1028 = vld [vmem:[#allocation5 + $0xe0] sm:$0xf]
        %v1029 = vld [vmem:[#allocation5 + $0xe4] sm:$0xf]
        %v1030 = vld [vmem:[#allocation5 + $0xe8] sm:$0xf]
        %v1031 = vld [vmem:[#allocation5 + $0xec] sm:$0xf]
        %v1032 = vld [vmem:[#allocation5 + $0xf0] sm:$0xf]
        %v1033 = vld [vmem:[#allocation5 + $0xf4] sm:$0xf]
        %v1034 = vld [vmem:[#allocation5 + $0xf8] sm:$0xf]
        %v1035 = vld [vmem:[#allocation5 + $0xfc] sm:$0xf]
        %v1036 = vld [vmem:[#allocation5 + $0x100] sm:$0xf]
        %v1037 = vld [vmem:[#allocation5 + $0x104] sm:$0xf]
        %v1038 = vld [vmem:[#allocation5 + $0x108] sm:$0xf]
        %v1039 = vld [vmem:[#allocation5 + $0x10c] sm:$0xf]
        %v1040 = vld [vmem:[#allocation5 + $0x110] sm:$0xf]
        %v1041 = vld [vmem:[#allocation5 + $0x114] sm:$0xf]
        %v1042 = vld [vmem:[#allocation5 + $0x118] sm:$0xf]
        %v1043 = vld [vmem:[#allocation5 + $0x11c] sm:$0xf]
        %v1116 = vunpack.c.l.b16 %v972
        %v1117 = vunpack.c.l.b16 %v973
        %v1118 = vunpack.c.l.b16 %v974
        %v1119 = vunpack.c.l.b16 %v975
        %v1120 = vunpack.c.l.b16 %v976
        %v1121 = vunpack.c.l.b16 %v977
        %v1122 = vunpack.c.l.b16 %v978
        %v1123 = vunpack.c.l.b16 %v979
        %v1124 = vunpack.c.l.b16 %v980
        %v1125 = vunpack.c.l.b16 %v981
        %v1126 = vunpack.c.l.b16 %v982
        %v1127 = vunpack.c.l.b16 %v983
        %v1128 = vunpack.c.l.b16 %v984
        %v1129 = vunpack.c.l.b16 %v985
        %v1130 = vunpack.c.l.b16 %v986
        %v1131 = vunpack.c.l.b16 %v987
        %v1132 = vunpack.c.l.b16 %v988
        %v1133 = vunpack.c.l.b16 %v989
        %v1134 = vunpack.c.l.b16 %v990
        %v1135 = vunpack.c.l.b16 %v991
        %v1136 = vunpack.c.l.b16 %v992
        %v1137 = vunpack.c.l.b16 %v993
        %v1138 = vunpack.c.l.b16 %v994
        %v1139 = vunpack.c.l.b16 %v995
        %v1140 = vunpack.c.l.b16 %v996
        %v1141 = vunpack.c.l.b16 %v997
        %v1142 = vunpack.c.l.b16 %v998
        %v1143 = vunpack.c.l.b16 %v999
        %v1144 = vunpack.c.l.b16 %v1000
        %v1145 = vunpack.c.l.b16 %v1001
        %v1146 = vunpack.c.l.b16 %v1002
        %v1147 = vunpack.c.l.b16 %v1003
        %v1148 = vunpack.c.l.b16 %v1004
        %v1149 = vunpack.c.l.b16 %v1005
        %v1150 = vunpack.c.l.b16 %v1006
        %v1151 = vunpack.c.l.b16 %v1007
        %v1152 = vunpack.c.l.b16 %v1008
        %v1153 = vunpack.c.l.b16 %v1009
        %v1154 = vunpack.c.l.b16 %v1010
        %v1155 = vunpack.c.l.b16 %v1011
        %v1156 = vunpack.c.l.b16 %v1012
        %v1157 = vunpack.c.l.b16 %v1013
        %v1158 = vunpack.c.l.b16 %v1014
        %v1159 = vunpack.c.l.b16 %v1015
        %v1160 = vunpack.c.l.b16 %v1016
        %v1161 = vunpack.c.l.b16 %v1017
        %v1162 = vunpack.c.l.b16 %v1018
        %v1163 = vunpack.c.l.b16 %v1019
        %v1164 = vunpack.c.l.b16 %v1020
        %v1165 = vunpack.c.l.b16 %v1021
        %v1166 = vunpack.c.l.b16 %v1022
        %v1167 = vunpack.c.l.b16 %v1023
        %v1168 = vunpack.c.l.b16 %v1024
        %v1169 = vunpack.c.l.b16 %v1025
        %v1170 = vunpack.c.l.b16 %v1026
        %v1171 = vunpack.c.l.b16 %v1027
        %v1172 = vunpack.c.l.b16 %v1028
        %v1173 = vunpack.c.l.b16 %v1029
        %v1174 = vunpack.c.l.b16 %v1030
        %v1175 = vunpack.c.l.b16 %v1031
        %v1176 = vunpack.c.l.b16 %v1032
        %v1177 = vunpack.c.l.b16 %v1033
        %v1178 = vunpack.c.l.b16 %v1034
        %v1179 = vunpack.c.l.b16 %v1035
        %v1180 = vunpack.c.l.b16 %v1036
        %v1181 = vunpack.c.l.b16 %v1037
        %v1182 = vunpack.c.l.b16 %v1038
        %v1183 = vunpack.c.l.b16 %v1039
        %v1184 = vunpack.c.l.b16 %v1040
        %v1185 = vunpack.c.l.b16 %v1041
        %v1186 = vunpack.c.l.b16 %v1042
        %v1187 = vunpack.c.l.b16 %v1043
        %v1188 = vpack.c.b16 %v1117, %v1116
        %v1189 = vpack.c.b16 %v1119, %v1118
        %v1190 = vpack.c.b16 %v1121, %v1120
        %v1191 = vpack.c.b16 %v1123, %v1122
        %v1192 = vpack.c.b16 %v1125, %v1124
        %v1193 = vpack.c.b16 %v1127, %v1126
        %v1194 = vpack.c.b16 %v1129, %v1128
        %v1195 = vpack.c.b16 %v1131, %v1130
        %v1196 = vpack.c.b16 %v1133, %v1132
        %v1197 = vpack.c.b16 %v1135, %v1134
        %v1198 = vpack.c.b16 %v1137, %v1136
        %v1199 = vpack.c.b16 %v1139, %v1138
        %v1200 = vpack.c.b16 %v1141, %v1140
        %v1201 = vpack.c.b16 %v1143, %v1142
        %v1202 = vpack.c.b16 %v1145, %v1144
        %v1203 = vpack.c.b16 %v1147, %v1146
        %v1204 = vpack.c.b16 %v1149, %v1148
        %v1205 = vpack.c.b16 %v1151, %v1150
        %v1206 = vpack.c.b16 %v1153, %v1152
        %v1207 = vpack.c.b16 %v1155, %v1154
        %v1208 = vpack.c.b16 %v1157, %v1156
        %v1209 = vpack.c.b16 %v1159, %v1158
        %v1210 = vpack.c.b16 %v1161, %v1160
        %v1211 = vpack.c.b16 %v1163, %v1162
        %v1212 = vpack.c.b16 %v1165, %v1164
        %v1213 = vpack.c.b16 %v1167, %v1166
        %v1214 = vpack.c.b16 %v1169, %v1168
        %v1215 = vpack.c.b16 %v1171, %v1170
        %v1216 = vpack.c.b16 %v1173, %v1172
        %v1217 = vpack.c.b16 %v1175, %v1174
        %v1218 = vpack.c.b16 %v1177, %v1176
        %v1219 = vpack.c.b16 %v1179, %v1178
        %v1220 = vpack.c.b16 %v1181, %v1180
        %v1221 = vpack.c.b16 %v1183, %v1182
        %v1222 = vpack.c.b16 %v1185, %v1184
        %v1223 = vpack.c.b16 %v1187, %v1186
        %v1261 = vsel %vm808, %v911, 0
        %v1264 = vsel %vm808, %v916, 0
        %v1267 = vsel %vm808, %v920, 0
        %v1270 = vsel %vm808, %v924, 0
        %v1273 = vsel %vm808, %v928, 0
        %v1276 = vsel %vm808, %v932, 0
        %v1279 = vsel %vm808, %v936, 0
        %v1282 = vsel %vm808, %v940, 0
        %v1285 = vsel %vm808, %v944, 0
        %v1288 = vsel %vm808, %v948, 0
        %v1291 = vsel %vm808, %v952, 0
        %v1294 = vsel %vm808, %v956, 0
        %v1297 = vsel %vm808, %v960, 0
        %v1300 = vsel %vm808, %v964, 0
        %v1303 = vsel %vm808, %v968, 0
        %v1306 = vsel %vm808, %v971, 0
        %1308 = vmatprep.subr.bf16.mxu0 0
        %1309 = vmatpush1.bf16.msra.mxu0 %v1195
        %1310 = vmatprep.subr.bf16.mxu0 0
        %1311 = vmatpush1.bf16.msra.mxu0 %v1194
        %1312 = vmatprep.subr.bf16.mxu0 0
        %1313 = vmatpush1.bf16.msra.mxu0 %v1193
        %1314 = vmatprep.subr.bf16.mxu0 0
        %1315 = vmatpush1.bf16.msra.mxu0 %v1192
        %1316 = vmatprep.subr.bf16.mxu0 0
        %1317 = vmatpush1.bf16.msra.mxu0 %v1191
        %1318 = vmatprep.subr.bf16.mxu0 0
        %1319 = vmatpush1.bf16.msra.mxu0 %v1190
        %1320 = vmatprep.subr.bf16.mxu0 0
        %1321 = vmatpush1.bf16.msra.mxu0 %v1189
        %1322 = vmatprep.subr.bf16.mxu0 0
        %1323 = vmatpush1.bf16.msra.mxu0 %v1188
        %1324 = vmatprep.subr.bf16.mxu0 0
        %1325 = vmatpush2.bf16.msra.mxu0 %v1203
        %1326 = vmatprep.subr.bf16.mxu0 0
        %1327 = vmatpush2.bf16.msra.mxu0 %v1202
        %1328 = vmatprep.subr.bf16.mxu0 0
        %1329 = vmatpush2.bf16.msra.mxu0 %v1201
        %1330 = vmatprep.subr.bf16.mxu0 0
        %1331 = vmatpush2.bf16.msra.mxu0 %v1200
        %1332 = vmatprep.subr.bf16.mxu0 0
        %1333 = vmatpush2.bf16.msra.mxu0 %v1199
        %1334 = vmatprep.subr.bf16.mxu0 0
        %1335 = vmatpush2.bf16.msra.mxu0 %v1198
        %1336 = vmatprep.subr.bf16.mxu0 0
        %1337 = vmatpush2.bf16.msra.mxu0 %v1197
        %1338 = vmatprep.subr.bf16.mxu0 0
        %1339 = vmatpush2.bf16.msra.mxu0 %v1196
        %1340 = vmatprep.mubr.bf16.mxu0 %v908
        %1341 = vmatmul.mubr.bf16.gmra.mxu0 %v907
        %v1342 = vpop.f32.mrf.mxu0
        %v1343 = vadd.f32 0.0, %v1342
        %v1344 = vpop.f32.mrf.mxu0
        %v1345 = vpop.f32.mrf.mxu0
        %v1346 = vadd.f32 0.0, %v1345
        %v1347 = vpop.f32.mrf.mxu0
        %1348 = vmatprep.mubr.bf16.mxu0 %v913
        %1349 = vmatmul.mubr.bf16.gmra.mxu0 %v912
        %v1350 = vpop.f32.mrf.mxu0
        %v1351 = vadd.f32 0.0, %v1350
        %v1352 = vpop.f32.mrf.mxu0
        %v1353 = vpop.f32.mrf.mxu0
        %v1354 = vadd.f32 0.0, %v1353
        %v1355 = vpop.f32.mrf.mxu0
        %1356 = vmatprep.mubr.bf16.mxu0 %v917
        %1357 = vmatmul.mubr.bf16.gmra.mxu0 %v910
        %v1358 = vpop.f32.mrf.mxu0
        %v1359 = vadd.f32 0.0, %v1358
        %v1360 = vpop.f32.mrf.mxu0
        %v1361 = vpop.f32.mrf.mxu0
        %v1362 = vadd.f32 0.0, %v1361
        %v1363 = vpop.f32.mrf.mxu0
        %1364 = vmatprep.mubr.bf16.mxu0 %v921
        %1365 = vmatmul.mubr.bf16.gmra.mxu0 %v915
        %v1366 = vpop.f32.mrf.mxu0
        %v1367 = vadd.f32 0.0, %v1366
        %v1368 = vpop.f32.mrf.mxu0
        %v1369 = vpop.f32.mrf.mxu0
        %v1370 = vadd.f32 0.0, %v1369
        %v1371 = vpop.f32.mrf.mxu0
        %1372 = vmatprep.mubr.bf16.mxu0 %v925
        %1373 = vmatmul.mubr.bf16.gmra.mxu0 %v919
        %v1374 = vpop.f32.mrf.mxu0
        %v1375 = vadd.f32 0.0, %v1374
        %v1376 = vpop.f32.mrf.mxu0
        %v1377 = vpop.f32.mrf.mxu0
        %v1378 = vadd.f32 0.0, %v1377
        %v1379 = vpop.f32.mrf.mxu0
        %1380 = vmatprep.mubr.bf16.mxu0 %v929
        %1381 = vmatmul.mubr.bf16.gmra.mxu0 %v923
        %v1382 = vpop.f32.mrf.mxu0
        %v1383 = vadd.f32 0.0, %v1382
        %v1384 = vpop.f32.mrf.mxu0
        %v1385 = vpop.f32.mrf.mxu0
        %v1386 = vadd.f32 0.0, %v1385
        %v1387 = vpop.f32.mrf.mxu0
        %1388 = vmatprep.mubr.bf16.mxu0 %v933
        %1389 = vmatmul.mubr.bf16.gmra.mxu0 %v927
        %v1390 = vpop.f32.mrf.mxu0
        %v1391 = vadd.f32 0.0, %v1390
        %v1392 = vpop.f32.mrf.mxu0
        %v1393 = vpop.f32.mrf.mxu0
        %v1394 = vadd.f32 0.0, %v1393
        %v1395 = vpop.f32.mrf.mxu0
        %1396 = vmatprep.mubr.bf16.mxu0 %v937
        %1397 = vmatmul.mubr.bf16.gmra.mxu0 %v931
        %v1398 = vpop.f32.mrf.mxu0
        %v1399 = vadd.f32 0.0, %v1398
        %v1400 = vpop.f32.mrf.mxu0
        %v1401 = vpop.f32.mrf.mxu0
        %v1402 = vadd.f32 0.0, %v1401
        %v1403 = vpop.f32.mrf.mxu0
        %1404 = vmatprep.mubr.bf16.mxu0 %v941
        %1405 = vmatmul.mubr.bf16.gmra.mxu0 %v935
        %v1406 = vpop.f32.mrf.mxu0
        %v1407 = vadd.f32 0.0, %v1406
        %v1408 = vpop.f32.mrf.mxu0
        %v1409 = vpop.f32.mrf.mxu0
        %v1410 = vadd.f32 0.0, %v1409
        %v1411 = vpop.f32.mrf.mxu0
        %1412 = vmatprep.mubr.bf16.mxu0 %v945
        %1413 = vmatmul.mubr.bf16.gmra.mxu0 %v939
        %v1414 = vpop.f32.mrf.mxu0
        %v1415 = vadd.f32 0.0, %v1414
        %v1416 = vpop.f32.mrf.mxu0
        %v1417 = vpop.f32.mrf.mxu0
        %v1418 = vadd.f32 0.0, %v1417
        %v1419 = vpop.f32.mrf.mxu0
        %1420 = vmatprep.mubr.bf16.mxu0 %v949
        %1421 = vmatmul.mubr.bf16.gmra.mxu0 %v943
        %v1422 = vpop.f32.mrf.mxu0
        %v1423 = vadd.f32 0.0, %v1422
        %v1424 = vpop.f32.mrf.mxu0
        %v1425 = vpop.f32.mrf.mxu0
        %v1426 = vadd.f32 0.0, %v1425
        %v1427 = vpop.f32.mrf.mxu0
        %1428 = vmatprep.mubr.bf16.mxu0 %v953
        %1429 = vmatmul.mubr.bf16.gmra.mxu0 %v947
        %v1430 = vpop.f32.mrf.mxu0
        %v1431 = vadd.f32 0.0, %v1430
        %v1432 = vpop.f32.mrf.mxu0
        %v1433 = vpop.f32.mrf.mxu0
        %v1434 = vadd.f32 0.0, %v1433
        %v1435 = vpop.f32.mrf.mxu0
        %1436 = vmatprep.mubr.bf16.mxu0 %v957
        %1437 = vmatmul.mubr.bf16.gmra.mxu0 %v951
        %v1438 = vpop.f32.mrf.mxu0
        %v1439 = vadd.f32 0.0, %v1438
        %v1440 = vpop.f32.mrf.mxu0
        %v1441 = vpop.f32.mrf.mxu0
        %v1442 = vadd.f32 0.0, %v1441
        %v1443 = vpop.f32.mrf.mxu0
        %1444 = vmatprep.mubr.bf16.mxu0 %v961
        %1445 = vmatmul.mubr.bf16.gmra.mxu0 %v955
        %v1446 = vpop.f32.mrf.mxu0
        %v1447 = vadd.f32 0.0, %v1446
        %v1448 = vpop.f32.mrf.mxu0
        %v1449 = vpop.f32.mrf.mxu0
        %v1450 = vadd.f32 0.0, %v1449
        %v1451 = vpop.f32.mrf.mxu0
        %1452 = vmatprep.mubr.bf16.mxu0 %v965
        %1453 = vmatmul.mubr.bf16.gmra.mxu0 %v959
        %v1454 = vpop.f32.mrf.mxu0
        %v1455 = vadd.f32 0.0, %v1454
        %v1456 = vpop.f32.mrf.mxu0
        %v1457 = vpop.f32.mrf.mxu0
        %v1458 = vadd.f32 0.0, %v1457
        %v1459 = vpop.f32.mrf.mxu0
        %1460 = vmatprep.mubr.bf16.mxu0 %v969
        %1461 = vmatmul.mubr.bf16.gmra.mxu0 %v963
        %v1462 = vpop.f32.mrf.mxu0
        %v1463 = vadd.f32 0.0, %v1462
        %v1464 = vpop.f32.mrf.mxu0
        %v1465 = vpop.f32.mrf.mxu0
        %v1466 = vadd.f32 0.0, %v1465
        %v1467 = vpop.f32.mrf.mxu0
        %1468 = vdwg.mxu0
        %1469 = vmatprep.subr.bf16.mxu0 0
        %1470 = vmatpush1.bf16.msra.mxu0 %v1211
        %1471 = vmatprep.subr.bf16.mxu0 0
        %1472 = vmatpush1.bf16.msra.mxu0 %v1210
        %1473 = vmatprep.subr.bf16.mxu0 0
        %1474 = vmatpush1.bf16.msra.mxu0 %v1209
        %1475 = vmatprep.subr.bf16.mxu0 0
        %1476 = vmatpush1.bf16.msra.mxu0 %v1208
        %1477 = vmatprep.subr.bf16.mxu0 0
        %1478 = vmatpush1.bf16.msra.mxu0 %v1207
        %1479 = vmatprep.subr.bf16.mxu0 0
        %1480 = vmatpush1.bf16.msra.mxu0 %v1206
        %1481 = vmatprep.subr.bf16.mxu0 0
        %1482 = vmatpush1.bf16.msra.mxu0 %v1205
        %1483 = vmatprep.subr.bf16.mxu0 0
        %1484 = vmatpush1.bf16.msra.mxu0 %v1204
        %1485 = vmatprep.subr.bf16.mxu0 0
        %1486 = vmatpush2.bf16.msra.mxu0 %v1219
        %1487 = vmatprep.subr.bf16.mxu0 0
        %1488 = vmatpush2.bf16.msra.mxu0 %v1218
        %1489 = vmatprep.subr.bf16.mxu0 0
        %1490 = vmatpush2.bf16.msra.mxu0 %v1217
        %1491 = vmatprep.subr.bf16.mxu0 0
        %1492 = vmatpush2.bf16.msra.mxu0 %v1216
        %1493 = vmatprep.subr.bf16.mxu0 0
        %1494 = vmatpush2.bf16.msra.mxu0 %v1215
        %1495 = vmatprep.subr.bf16.mxu0 0
        %1496 = vmatpush2.bf16.msra.mxu0 %v1214
        %1497 = vmatprep.subr.bf16.mxu0 0
        %1498 = vmatpush2.bf16.msra.mxu0 %v1213
        %1499 = vmatprep.subr.bf16.mxu0 0
        %1500 = vmatpush2.bf16.msra.mxu0 %v1212
        %1501 = vmatprep.mubr.bf16.mxu0 %v910
        %1502 = vmatmul.mubr.bf16.gmra.mxu0 %v909
        %v1503 = vpop.f32.mrf.mxu0
        %v1504 = vadd.f32 %v1343, %v1503
        %v1505 = vpop.f32.mrf.mxu0
        %v1506 = vpop.f32.mrf.mxu0
        %v1507 = vadd.f32 %v1346, %v1506
        %v1508 = vpop.f32.mrf.mxu0
        %1509 = vmatprep.mubr.bf16.mxu0 %v915
        %1510 = vmatmul.mubr.bf16.gmra.mxu0 %v914
        %v1511 = vpop.f32.mrf.mxu0
        %v1512 = vadd.f32 %v1351, %v1511
        %v1513 = vpop.f32.mrf.mxu0
        %v1514 = vpop.f32.mrf.mxu0
        %v1515 = vadd.f32 %v1354, %v1514
        %v1516 = vpop.f32.mrf.mxu0
        %1517 = vmatprep.mubr.bf16.mxu0 %v919
        %1518 = vmatmul.mubr.bf16.gmra.mxu0 %v918
        %v1519 = vpop.f32.mrf.mxu0
        %v1520 = vadd.f32 %v1359, %v1519
        %v1521 = vpop.f32.mrf.mxu0
        %v1522 = vpop.f32.mrf.mxu0
        %v1523 = vadd.f32 %v1362, %v1522
        %v1524 = vpop.f32.mrf.mxu0
        %1525 = vmatprep.mubr.bf16.mxu0 %v923
        %1526 = vmatmul.mubr.bf16.gmra.mxu0 %v922
        %v1527 = vpop.f32.mrf.mxu0
        %v1528 = vadd.f32 %v1367, %v1527
        %v1529 = vpop.f32.mrf.mxu0
        %v1530 = vpop.f32.mrf.mxu0
        %v1531 = vadd.f32 %v1370, %v1530
        %v1532 = vpop.f32.mrf.mxu0
        %1533 = vmatprep.mubr.bf16.mxu0 %v927
        %1534 = vmatmul.mubr.bf16.gmra.mxu0 %v926
        %v1535 = vpop.f32.mrf.mxu0
        %v1536 = vadd.f32 %v1375, %v1535
        %v1537 = vpop.f32.mrf.mxu0
        %v1538 = vpop.f32.mrf.mxu0
        %v1539 = vadd.f32 %v1378, %v1538
        %v1540 = vpop.f32.mrf.mxu0
        %1541 = vmatprep.mubr.bf16.mxu0 %v931
        %1542 = vmatmul.mubr.bf16.gmra.mxu0 %v930
        %v1543 = vpop.f32.mrf.mxu0
        %v1544 = vadd.f32 %v1383, %v1543
        %v1545 = vpop.f32.mrf.mxu0
        %v1546 = vpop.f32.mrf.mxu0
        %v1547 = vadd.f32 %v1386, %v1546
        %v1548 = vpop.f32.mrf.mxu0
        %1549 = vmatprep.mubr.bf16.mxu0 %v935
        %1550 = vmatmul.mubr.bf16.gmra.mxu0 %v934
        %v1551 = vpop.f32.mrf.mxu0
        %v1552 = vadd.f32 %v1391, %v1551
        %v1553 = vpop.f32.mrf.mxu0
        %v1554 = vpop.f32.mrf.mxu0
        %v1555 = vadd.f32 %v1394, %v1554
        %v1556 = vpop.f32.mrf.mxu0
        %1557 = vmatprep.mubr.bf16.mxu0 %v939
        %1558 = vmatmul.mubr.bf16.gmra.mxu0 %v938
        %v1559 = vpop.f32.mrf.mxu0
        %v1560 = vadd.f32 %v1399, %v1559
        %v1561 = vpop.f32.mrf.mxu0
        %v1562 = vpop.f32.mrf.mxu0
        %v1563 = vadd.f32 %v1402, %v1562
        %v1564 = vpop.f32.mrf.mxu0
        %1565 = vmatprep.mubr.bf16.mxu0 %v943
        %1566 = vmatmul.mubr.bf16.gmra.mxu0 %v942
        %v1567 = vpop.f32.mrf.mxu0
        %v1568 = vadd.f32 %v1407, %v1567
        %v1569 = vpop.f32.mrf.mxu0
        %v1570 = vpop.f32.mrf.mxu0
        %v1571 = vadd.f32 %v1410, %v1570
        %v1572 = vpop.f32.mrf.mxu0
        %1573 = vmatprep.mubr.bf16.mxu0 %v947
        %1574 = vmatmul.mubr.bf16.gmra.mxu0 %v946
        %v1575 = vpop.f32.mrf.mxu0
        %v1576 = vadd.f32 %v1415, %v1575
        %v1577 = vpop.f32.mrf.mxu0
        %v1578 = vpop.f32.mrf.mxu0
        %v1579 = vadd.f32 %v1418, %v1578
        %v1580 = vpop.f32.mrf.mxu0
        %1581 = vmatprep.mubr.bf16.mxu0 %v951
        %1582 = vmatmul.mubr.bf16.gmra.mxu0 %v950
        %v1583 = vpop.f32.mrf.mxu0
        %v1584 = vadd.f32 %v1423, %v1583
        %v1585 = vpop.f32.mrf.mxu0
        %v1586 = vpop.f32.mrf.mxu0
        %v1587 = vadd.f32 %v1426, %v1586
        %v1588 = vpop.f32.mrf.mxu0
        %1589 = vmatprep.mubr.bf16.mxu0 %v955
        %1590 = vmatmul.mubr.bf16.gmra.mxu0 %v954
        %v1591 = vpop.f32.mrf.mxu0
        %v1592 = vadd.f32 %v1431, %v1591
        %v1593 = vpop.f32.mrf.mxu0
        %v1594 = vpop.f32.mrf.mxu0
        %v1595 = vadd.f32 %v1434, %v1594
        %v1596 = vpop.f32.mrf.mxu0
        %1597 = vmatprep.mubr.bf16.mxu0 %v959
        %1598 = vmatmul.mubr.bf16.gmra.mxu0 %v958
        %v1599 = vpop.f32.mrf.mxu0
        %v1600 = vadd.f32 %v1439, %v1599
        %v1601 = vpop.f32.mrf.mxu0
        %v1602 = vpop.f32.mrf.mxu0
        %v1603 = vadd.f32 %v1442, %v1602
        %v1604 = vpop.f32.mrf.mxu0
        %1605 = vmatprep.mubr.bf16.mxu0 %v963
        %1606 = vmatmul.mubr.bf16.gmra.mxu0 %v962
        %v1607 = vpop.f32.mrf.mxu0
        %v1608 = vadd.f32 %v1447, %v1607
        %v1609 = vpop.f32.mrf.mxu0
        %v1610 = vpop.f32.mrf.mxu0
        %v1611 = vadd.f32 %v1450, %v1610
        %v1612 = vpop.f32.mrf.mxu0
        %1613 = vmatprep.mubr.bf16.mxu0 %v967
        %1614 = vmatmul.mubr.bf16.gmra.mxu0 %v966
        %v1615 = vpop.f32.mrf.mxu0
        %v1616 = vadd.f32 %v1455, %v1615
        %v1617 = vpop.f32.mrf.mxu0
        %v1618 = vpop.f32.mrf.mxu0
        %v1619 = vadd.f32 %v1458, %v1618
        %v1620 = vpop.f32.mrf.mxu0
        %1621 = vmatprep.mubr.bf16.mxu0 %v907
        %1622 = vmatmul.mubr.bf16.gmra.mxu0 %v970
        %v1623 = vpop.f32.mrf.mxu0
        %v1624 = vadd.f32 %v1463, %v1623
        %v1625 = vpop.f32.mrf.mxu0
        %v1626 = vpop.f32.mrf.mxu0
        %v1627 = vadd.f32 %v1466, %v1626
        %v1628 = vpop.f32.mrf.mxu0
        %1629 = vdwg.mxu0
        %1630 = vmatprep.subr.bf16.mxu0 0
        %1631 = vmatpush1.bf16.msra.mxu0 0
        %1632 = vmatprep.subr.bf16.mxu0 0
        %1633 = vmatpush1.bf16.msra.mxu0 0
        %1634 = vmatprep.subr.bf16.mxu0 0
        %1635 = vmatpush1.bf16.msra.mxu0 0
        %1636 = vmatprep.subr.bf16.mxu0 0
        %1637 = vmatpush1.bf16.msra.mxu0 0
        %1638 = vmatprep.subr.bf16.mxu0 0
        %1639 = vmatpush1.bf16.msra.mxu0 %v1223
        %1640 = vmatprep.subr.bf16.mxu0 0
        %1641 = vmatpush1.bf16.msra.mxu0 %v1222
        %1642 = vmatprep.subr.bf16.mxu0 0
        %1643 = vmatpush1.bf16.msra.mxu0 %v1221
        %1644 = vmatprep.subr.bf16.mxu0 0
        %1645 = vmatpush1.bf16.msra.mxu0 %v1220
        %1646 = vmatprep.subr.bf16.mxu0 0
        %1647 = vmatpush2.bf16.msra.mxu0 0
        %1648 = vmatprep.subr.bf16.mxu0 0
        %1649 = vmatpush2.bf16.msra.mxu0 0
        %1650 = vmatprep.subr.bf16.mxu0 0
        %1651 = vmatpush2.bf16.msra.mxu0 0
        %1652 = vmatprep.subr.bf16.mxu0 0
        %1653 = vmatpush2.bf16.msra.mxu0 0
        %1654 = vmatprep.subr.bf16.mxu0 0
        %1655 = vmatpush2.bf16.msra.mxu0 0
        %1656 = vmatprep.subr.bf16.mxu0 0
        %1657 = vmatpush2.bf16.msra.mxu0 0
        %1658 = vmatprep.subr.bf16.mxu0 0
        %1659 = vmatpush2.bf16.msra.mxu0 0
        %1660 = vmatprep.subr.bf16.mxu0 0
        %1661 = vmatpush2.bf16.msra.mxu0 0
        %1662 = vmatprep.mubr.bf16.mxu0 0
        %1663 = vmatmul.mubr.bf16.gmra.mxu0 %v1261
        %v1664 = vpop.f32.mrf.mxu0
        %v1665 = vadd.f32 %v1504, %v1664
        %v1666 = vpop.f32.mrf.mxu0
        %v1667 = vpop.f32.mrf.mxu0
        %v1668 = vadd.f32 %v1507, %v1667
        %v1669 = vpop.f32.mrf.mxu0
        %1670 = vmatprep.mubr.bf16.mxu0 0
        %1671 = vmatmul.mubr.bf16.gmra.mxu0 %v1264
        %v1672 = vpop.f32.mrf.mxu0
        %v1673 = vadd.f32 %v1512, %v1672
        %v1674 = vpop.f32.mrf.mxu0
        %v1675 = vpop.f32.mrf.mxu0
        %v1676 = vadd.f32 %v1515, %v1675
        %v1677 = vpop.f32.mrf.mxu0
        %1678 = vmatprep.mubr.bf16.mxu0 0
        %1679 = vmatmul.mubr.bf16.gmra.mxu0 %v1267
        %v1680 = vpop.f32.mrf.mxu0
        %v1681 = vadd.f32 %v1520, %v1680
        %v1682 = vpop.f32.mrf.mxu0
        %v1683 = vpop.f32.mrf.mxu0
        %v1684 = vadd.f32 %v1523, %v1683
        %v1685 = vpop.f32.mrf.mxu0
        %1686 = vmatprep.mubr.bf16.mxu0 0
        %1687 = vmatmul.mubr.bf16.gmra.mxu0 %v1270
        %v1688 = vpop.f32.mrf.mxu0
        %v1689 = vadd.f32 %v1528, %v1688
        %v1690 = vpop.f32.mrf.mxu0
        %v1691 = vpop.f32.mrf.mxu0
        %v1692 = vadd.f32 %v1531, %v1691
        %v1693 = vpop.f32.mrf.mxu0
        %1694 = vmatprep.mubr.bf16.mxu0 0
        %1695 = vmatmul.mubr.bf16.gmra.mxu0 %v1273
        %v1696 = vpop.f32.mrf.mxu0
        %v1697 = vadd.f32 %v1536, %v1696
        %v1698 = vpop.f32.mrf.mxu0
        %v1699 = vpop.f32.mrf.mxu0
        %v1700 = vadd.f32 %v1539, %v1699
        %v1701 = vpop.f32.mrf.mxu0
        %1702 = vmatprep.mubr.bf16.mxu0 0
        %1703 = vmatmul.mubr.bf16.gmra.mxu0 %v1276
        %v1704 = vpop.f32.mrf.mxu0
        %v1705 = vadd.f32 %v1544, %v1704
        %v1706 = vpop.f32.mrf.mxu0
        %v1707 = vpop.f32.mrf.mxu0
        %v1708 = vadd.f32 %v1547, %v1707
        %v1709 = vpop.f32.mrf.mxu0
        %1710 = vmatprep.mubr.bf16.mxu0 0
        %1711 = vmatmul.mubr.bf16.gmra.mxu0 %v1279
        %v1712 = vpop.f32.mrf.mxu0
        %v1713 = vadd.f32 %v1552, %v1712
        %v1714 = vpop.f32.mrf.mxu0
        %v1715 = vpop.f32.mrf.mxu0
        %v1716 = vadd.f32 %v1555, %v1715
        %v1717 = vpop.f32.mrf.mxu0
        %1718 = vmatprep.mubr.bf16.mxu0 0
        %1719 = vmatmul.mubr.bf16.gmra.mxu0 %v1282
        %v1720 = vpop.f32.mrf.mxu0
        %v1721 = vadd.f32 %v1560, %v1720
        %v1722 = vpop.f32.mrf.mxu0
        %v1723 = vpop.f32.mrf.mxu0
        %v1724 = vadd.f32 %v1563, %v1723
        %v1725 = vpop.f32.mrf.mxu0
        %1726 = vmatprep.mubr.bf16.mxu0 0
        %1727 = vmatmul.mubr.bf16.gmra.mxu0 %v1285
        %v1728 = vpop.f32.mrf.mxu0
        %v1729 = vadd.f32 %v1568, %v1728
        %v1730 = vpop.f32.mrf.mxu0
        %v1731 = vpop.f32.mrf.mxu0
        %v1732 = vadd.f32 %v1571, %v1731
        %v1733 = vpop.f32.mrf.mxu0
        %1734 = vmatprep.mubr.bf16.mxu0 0
        %1735 = vmatmul.mubr.bf16.gmra.mxu0 %v1288
        %v1736 = vpop.f32.mrf.mxu0
        %v1737 = vadd.f32 %v1576, %v1736
        %v1738 = vpop.f32.mrf.mxu0
        %v1739 = vpop.f32.mrf.mxu0
        %v1740 = vadd.f32 %v1579, %v1739
        %v1741 = vpop.f32.mrf.mxu0
        %1742 = vmatprep.mubr.bf16.mxu0 0
        %1743 = vmatmul.mubr.bf16.gmra.mxu0 %v1291
        %v1744 = vpop.f32.mrf.mxu0
        %v1745 = vadd.f32 %v1584, %v1744
        %v1746 = vpop.f32.mrf.mxu0
        %v1747 = vpop.f32.mrf.mxu0
        %v1748 = vadd.f32 %v1587, %v1747
        %v1749 = vpop.f32.mrf.mxu0
        %1750 = vmatprep.mubr.bf16.mxu0 0
        %1751 = vmatmul.mubr.bf16.gmra.mxu0 %v1294
        %v1752 = vpop.f32.mrf.mxu0
        %v1753 = vadd.f32 %v1592, %v1752
        %v1754 = vpop.f32.mrf.mxu0
        %v1755 = vpop.f32.mrf.mxu0
        %v1756 = vadd.f32 %v1595, %v1755
        %v1757 = vpop.f32.mrf.mxu0
        %1758 = vmatprep.mubr.bf16.mxu0 0
        %1759 = vmatmul.mubr.bf16.gmra.mxu0 %v1297
        %v1760 = vpop.f32.mrf.mxu0
        %v1761 = vadd.f32 %v1600, %v1760
        %v1762 = vpop.f32.mrf.mxu0
        %v1763 = vpop.f32.mrf.mxu0
        %v1764 = vadd.f32 %v1603, %v1763
        %v1765 = vpop.f32.mrf.mxu0
        %1766 = vmatprep.mubr.bf16.mxu0 0
        %1767 = vmatmul.mubr.bf16.gmra.mxu0 %v1300
        %v1768 = vpop.f32.mrf.mxu0
        %v1769 = vadd.f32 %v1608, %v1768
        %v1770 = vpop.f32.mrf.mxu0
        %v1771 = vpop.f32.mrf.mxu0
        %v1772 = vadd.f32 %v1611, %v1771
        %v1773 = vpop.f32.mrf.mxu0
        %1774 = vmatprep.mubr.bf16.mxu0 0
        %1775 = vmatmul.mubr.bf16.gmra.mxu0 %v1303
        %v1776 = vpop.f32.mrf.mxu0
        %v1777 = vadd.f32 %v1616, %v1776
        %v1778 = vpop.f32.mrf.mxu0
        %v1779 = vpop.f32.mrf.mxu0
        %v1780 = vadd.f32 %v1619, %v1779
        %v1781 = vpop.f32.mrf.mxu0
        %1782 = vmatprep.mubr.bf16.mxu0 0
        %1783 = vmatmul.mubr.bf16.gmra.mxu0 %v1306
        %v1784 = vpop.f32.mrf.mxu0
        %v1785 = vadd.f32 %v1624, %v1784
        %v1786 = vpop.f32.mrf.mxu0
        %v1787 = vpop.f32.mrf.mxu0
        %v1788 = vadd.f32 %v1627, %v1787
        %v1789 = vpop.f32.mrf.mxu0
        %1790 = vdwg.mxu0
        %1791 = vst [vmem:[%s207] sm:$0xff] %v1665
        %1792 = vst [vmem:[%s207 + $0x8] sm:$0xff] %v1668
        %1793 = vst [vmem:[%s207 + $0x10] sm:$0xff] %v1673
        %1794 = vst [vmem:[%s207 + $0x18] sm:$0xff] %v1676
        %1795 = vst [vmem:[%s207 + $0x20] sm:$0xff] %v1681
        %1796 = vst [vmem:[%s207 + $0x28] sm:$0xff] %v1684
        %1797 = vst [vmem:[%s207 + $0x30] sm:$0xff] %v1689
        %1798 = vst [vmem:[%s207 + $0x38] sm:$0xff] %v1692
        %1799 = vst [vmem:[%s207 + $0x40] sm:$0xff] %v1697
        %1800 = vst [vmem:[%s207 + $0x48] sm:$0xff] %v1700
        %1801 = vst [vmem:[%s207 + $0x50] sm:$0xff] %v1705
        %1802 = vst [vmem:[%s207 + $0x58] sm:$0xff] %v1708
        %1803 = vst [vmem:[%s207 + $0x60] sm:$0xff] %v1713
        %1804 = vst [vmem:[%s207 + $0x68] sm:$0xff] %v1716
        %1805 = vst [vmem:[%s207 + $0x70] sm:$0xff] %v1721
        %1806 = vst [vmem:[%s207 + $0x78] sm:$0xff] %v1724
        %1807 = vst [vmem:[%s207 + $0x80] sm:$0xff] %v1729
        %1808 = vst [vmem:[%s207 + $0x88] sm:$0xff] %v1732
        %1809 = vst [vmem:[%s207 + $0x90] sm:$0xff] %v1737
        %1810 = vst [vmem:[%s207 + $0x98] sm:$0xff] %v1740
        %1811 = vst [vmem:[%s207 + $0xa0] sm:$0xff] %v1745
        %1812 = vst [vmem:[%s207 + $0xa8] sm:$0xff] %v1748
        %1813 = vst [vmem:[%s207 + $0xb0] sm:$0xff] %v1753
        %1814 = vst [vmem:[%s207 + $0xb8] sm:$0xff] %v1756
        %1815 = vst [vmem:[%s207 + $0xc0] sm:$0xff] %v1761
        %1816 = vst [vmem:[%s207 + $0xc8] sm:$0xff] %v1764
        %1817 = vst [vmem:[%s207 + $0xd0] sm:$0xff] %v1769
        %1818 = vst [vmem:[%s207 + $0xd8] sm:$0xff] %v1772
        %1819 = vst [vmem:[%s207 + $0xe0] sm:$0xff] %v1777
        %1820 = vst [vmem:[%s207 + $0xe8] sm:$0xff] %v1780
        %1821 = vst [vmem:[%s207 + $0xf0] sm:$0xff] %v1785
        %1822 = vst [vmem:[%s207 + $0xf8] sm:$0xff] %v1788
        %v1823 = vadd.f32 %v1665, %v1668
        %v1824 = vadd.f32 %v1823, %v1673
        %v1825 = vadd.f32 %v1824, %v1676
        %v1826 = vadd.f32 %v1825, %v1681
        %v1827 = vadd.f32 %v1826, %v1684
        %v1828 = vadd.f32 %v1827, %v1689
        %v1829 = vadd.f32 %v1828, %v1692
        %v1830 = vadd.f32 %v1829, %v1697
        %v1831 = vadd.f32 %v1830, %v1700
        %v1832 = vadd.f32 %v1831, %v1705
        %v1833 = vadd.f32 %v1832, %v1708
        %v1834 = vadd.f32 %v1833, %v1713
        %v1835 = vadd.f32 %v1834, %v1716
        %v1836 = vadd.f32 %v1835, %v1721
        %v1837 = vadd.f32 %v1836, %v1724
        %v1838 = vadd.f32 %v1837, %v1729
        %v1839 = vadd.f32 %v1838, %v1732
        %v1840 = vadd.f32 %v1839, %v1737
        %v1841 = vadd.f32 %v1840, %v1740
        %v1842 = vadd.f32 %v1841, %v1745
        %v1843 = vadd.f32 %v1842, %v1748
        %v1844 = vadd.f32 %v1843, %v1753
        %v1845 = vadd.f32 %v1844, %v1756
        %v1846 = vadd.f32 %v1845, %v1761
        %v1847 = vadd.f32 %v1846, %v1764
        %v1848 = vadd.f32 %v1847, %v1769
        %v1849 = vadd.f32 %v1848, %v1772
        %v1850 = vadd.f32 %v1849, %v1777
        %v1851 = vadd.f32 %v1850, %v1780
        %v1852 = vadd.f32 %v1851, %v1785
        %v1853 = vadd.f32 %v1852, %v1788
        %v1854 = vrot.slane %v1853, 4
        %v1855 = vadd.f32 %v1853, %v1854
        %v1856 = vrot.slane %v1855, 2
        %v1857 = vadd.f32 %v1855, %v1856
        %v1858 = vrot.slane %v1857, 1
        %v1859 = vadd.f32 %v1857, %v1858
        %v1860 = vmul.f32 %v1665, %v1665
        %v1861 = vmul.f32 %v1668, %v1668
        %v1862 = vmul.f32 %v1673, %v1673
        %v1863 = vmul.f32 %v1676, %v1676
        %v1864 = vmul.f32 %v1681, %v1681
        %v1865 = vmul.f32 %v1684, %v1684
        %v1866 = vmul.f32 %v1689, %v1689
        %v1867 = vmul.f32 %v1692, %v1692
        %v1868 = vmul.f32 %v1697, %v1697
        %v1869 = vmul.f32 %v1700, %v1700
        %v1870 = vmul.f32 %v1705, %v1705
        %v1871 = vmul.f32 %v1708, %v1708
        %v1872 = vmul.f32 %v1713, %v1713
        %v1873 = vmul.f32 %v1716, %v1716
        %v1874 = vmul.f32 %v1721, %v1721
        %v1875 = vmul.f32 %v1724, %v1724
        %v1876 = vmul.f32 %v1729, %v1729
        %v1877 = vmul.f32 %v1732, %v1732
        %v1878 = vmul.f32 %v1737, %v1737
        %v1879 = vmul.f32 %v1740, %v1740
        %v1880 = vmul.f32 %v1745, %v1745
        %v1881 = vmul.f32 %v1748, %v1748
        %v1882 = vmul.f32 %v1753, %v1753
        %v1883 = vmul.f32 %v1756, %v1756
        %v1884 = vmul.f32 %v1761, %v1761
        %v1885 = vmul.f32 %v1764, %v1764
        %v1886 = vmul.f32 %v1769, %v1769
        %v1887 = vmul.f32 %v1772, %v1772
        %v1888 = vmul.f32 %v1777, %v1777
        %v1889 = vmul.f32 %v1780, %v1780
        %v1890 = vmul.f32 %v1785, %v1785
        %v1891 = vmul.f32 %v1788, %v1788
        %v1892 = vadd.f32 %v1860, %v1861
        %v1893 = vadd.f32 %v1892, %v1862
        %v1894 = vadd.f32 %v1893, %v1863
        %v1895 = vadd.f32 %v1894, %v1864
        %v1896 = vadd.f32 %v1895, %v1865
        %v1897 = vadd.f32 %v1896, %v1866
        %v1898 = vadd.f32 %v1897, %v1867
        %v1899 = vadd.f32 %v1898, %v1868
        %v1900 = vadd.f32 %v1899, %v1869
        %v1901 = vadd.f32 %v1900, %v1870
        %v1902 = vadd.f32 %v1901, %v1871
        %v1903 = vadd.f32 %v1902, %v1872
        %v1904 = vadd.f32 %v1903, %v1873
        %v1905 = vadd.f32 %v1904, %v1874
        %v1906 = vadd.f32 %v1905, %v1875
        %v1907 = vadd.f32 %v1906, %v1876
        %v1908 = vadd.f32 %v1907, %v1877
        %v1909 = vadd.f32 %v1908, %v1878
        %v1910 = vadd.f32 %v1909, %v1879
        %v1911 = vadd.f32 %v1910, %v1880
        %v1912 = vadd.f32 %v1911, %v1881
        %v1913 = vadd.f32 %v1912, %v1882
        %v1914 = vadd.f32 %v1913, %v1883
        %v1915 = vadd.f32 %v1914, %v1884
        %v1916 = vadd.f32 %v1915, %v1885
        %v1917 = vadd.f32 %v1916, %v1886
        %v1918 = vadd.f32 %v1917, %v1887
        %v1919 = vadd.f32 %v1918, %v1888
        %v1920 = vadd.f32 %v1919, %v1889
        %v1921 = vadd.f32 %v1920, %v1890
        %v1922 = vadd.f32 %v1921, %v1891
        %v1923 = vrot.slane %v1922, 4
        %v1924 = vadd.f32 %v1922, %v1923
        %v1925 = vrot.slane %v1924, 2
        %v1926 = vadd.f32 %v1924, %v1925
        %v1927 = vrot.slane %v1926, 1
        %v1928 = vadd.f32 %v1926, %v1927
        %v1929 = vsel %vm279, %v1859, %v1928
        %1930 = vst [vmem:[%s214] sm:$0x3] %v1929
        %s1931 = sand.u32 %s80, 1
        %s1932 = scalar_lea.sflag [#allocation4], %s1931
        %s1933 = sand.u32 %s80, 1
        %s1934 = smul.addr %s1933, 256
        %s1935 = scalar_lea.vmem [#allocation7], %s1934
        %s1936 = sand.u32 %s106, 1
        %s1937 = scalar_lea.sflag [#allocation9], %s1936
        %s1938 = sand.u32 %s106, 1
        %s1939 = smul.addr %s1938, 2
        %s1940 = scalar_lea.vmem [#allocation8], %s1939
        // Predicated region
        $region37: #{tpu_custom_call.1} parent=27 // pred_check
          %p1941 = pneg %p90
        $region38: #{tpu_custom_call.1} parent=27 // pred_check_branch
          %1943 = sbr.rel (%p1941) target = $region40
        $region39: #{tpu_custom_call.1} parent=27 // pred_region
          %s1945 = ssub.s32 4096, 4096
          %1946 = vsyncadd %s1932, %s1945
          %s1947 = smul.addr %s25, 32
          %s1948 = smul.addr %s1947, 128
          %s1949 = scalar_lea.hbm %s2, %s1948
          %s1950 = sshll.u32 %s1935, 4
          %s1951 = int_to_ptr.vmem [resolvable:$true] %s1950
          %1956 = dma.vmem_to_hbm [thread:$0]  %s1951, 4096, %s1949, %s1932, 128, 128, 8
        $region40: #{tpu_custom_call.1} parent=27 // pred_fallthru
          _
        // Predicated region
        $region41: #{tpu_custom_call.1} parent=27 // pred_check
          %p1957 = pneg %p116
        $region42: #{tpu_custom_call.1} parent=27 // pred_check_branch
          %1959 = sbr.rel (%p1957) target = $region44
        $region43: #{tpu_custom_call.1} parent=27 // pred_region
          %s1961 = ssub.s32 32, 32
          %1962 = vsyncadd %s1937, %s1961
          %s1963 = smul.addr %s25, 32
          %s1964 = scalar_lea.hbm %s3, %s1963
          %s1966 = sshll.u32 %s1940, 4
          %s1967 = int_to_ptr.vmem [resolvable:$true] %s1966
          %1969 = dma.vmem_to_hbm [thread:$0]  %s1967, 32, %s1964, %s1937
        $region44: #{tpu_custom_call.1} parent=27 // pred_fallthru
          _
      $region28: #{tpu_custom_call.1} parent=5 // pred_fallthru
        _
      %p1970 = scmp.le.s32.totalorder 2, %s20
      // Predicated region
      $region45: #{tpu_custom_call.1} parent=5 // pred_check
        %p1971 = pneg %p1970
      $region46: #{tpu_custom_call.1} parent=5 // pred_check_branch
        %1973 = sbr.rel (%p1971) target = $region48
      $region47: #{tpu_custom_call.1} parent=5 // pred_region
        %s1974 = ssub.s32 %s20, 2
        // Predicated region
        $region49: #{tpu_custom_call.1} parent=47 // pred_check
          %p1975 = pneg %p96
        $region50: #{tpu_custom_call.1} parent=47 // pred_check_branch
          %1977 = sbr.rel (%p1975) target = $region52
        $region51: #{tpu_custom_call.1} parent=47 // pred_region
          %s1978 = sand.u32 %s81, 1
          %s1979 = scalar_lea.sflag [#allocation4], %s1978
          %s1980 = sand.u32 %s81, 1
          %s1981 = smul.addr %s1980, 256
          %s1982 = scalar_lea.vmem [#allocation7], %s1981
          %1983 = dma.done %s1979, 4096
        $region52: #{tpu_custom_call.1} parent=47 // pred_fallthru
          _
        // Predicated region
        $region53: #{tpu_custom_call.1} parent=47 // pred_check
          %p1984 = pneg %p122
        $region54: #{tpu_custom_call.1} parent=47 // pred_check_branch
          %1986 = sbr.rel (%p1984) target = $region56
        $region55: #{tpu_custom_call.1} parent=47 // pred_region
          %s1987 = sand.u32 %s107, 1
          %s1988 = scalar_lea.sflag [#allocation9], %s1987
          %s1989 = sand.u32 %s107, 1
          %s1990 = smul.addr %s1989, 2
          %s1991 = scalar_lea.vmem [#allocation8], %s1990
          %1992 = dma.done %s1988, 32
        $region56: #{tpu_custom_call.1} parent=47 // pred_fallthru
          _
      $region48: #{tpu_custom_call.1} parent=5 // pred_fallthru
        _
    $region6: #{tpu_custom_call.1} parent=1 // loop_footer
      %s24 = sadd.s32 1, %s20
    $region7: #{tpu_custom_call.1} parent=1 // loop_footer_branch
      %19 = sbr.rel target = $region3
    $region8: #{tpu_custom_call.1} parent=1 // loop_exit
      _
    %1993 = vsyncpa [#allocation3], 1
    %s1994 = scalar_lea.sflag [#allocation3], 1
    %1995 = vsyncpa %s1994, 1
    %1996 = vsyncpa [#allocation6], 1
    %1997 = vsyncpa [#allocation4], 1
    %s1998 = scalar_lea.sflag [#allocation4], 1
    %1999 = vsyncpa %s1998, 1
    %2000 = vsyncpa [#allocation9], 1
    %s2001 = scalar_lea.sflag [#allocation9], 1
    %2002 = vsyncpa %s2001, 1

</llo_original>
